<compile_context>
chip_gen: v5e
topology: v5e:2x2
jax: 0.10.0
libtpu: 0.0.40
codegen_flags: <defaults>
</compile_context>

<pallas_src>
import functools

import jax
import jax.numpy as jnp
import numpy as np
from jax.experimental import pallas as pl
from jax.experimental.pallas import tpu as pltpu


# ---------------------------------------------------------------------------
# Pallas kernel: the full encoder stack.
#   grid axis 0 = batch chunk ("parallel"), grid axis 1 = layer ("arbitrary").
#   The output block (constant index across the layer axis) carries the
#   activations in VMEM from layer to layer.
# ---------------------------------------------------------------------------
def encoder_stack_kernel(
    x_ref, mask_ref,
    wq_ref, bq_ref, wk_ref, bk_ref, wv_ref, bv_ref,
    wo_ref, bo_ref, g1_ref, be1_ref,
    w1_ref, b1_ref, w2_ref, b2_ref, g2_ref, be2_ref,
    out_ref,
    ctx_scr,
    *, bc, seq, num_heads, depth,
):
    layer = pl.program_id(1)

    # Layer 0 (per batch chunk): pull the embedded activations into the
    # resident output block; afterwards out_ref is the layer-to-layer carry.
    @pl.when(layer == 0)
    def _():
        out_ref[...] = x_ref[...]

    x = out_ref[...].astype(jnp.float32)                 # [bc*S, D]
    x_bf = x.astype(jnp.bfloat16)                        # MXU operand
    d_model = num_heads * depth

    # Hoisted out of the head loop (JAX does not CSE broadcasts).
    neg_mask = mask_ref[...].astype(jnp.float32) * (-1.0e9)   # [bc, 1, S]

    # --- fused, full-width QKV projections (N = D); scale folded in wq/bq ---
    q = jnp.dot(x_bf, wq_ref[...], preferred_element_type=jnp.float32) + bq_ref[...]
    k = jnp.dot(x_bf, wk_ref[...], preferred_element_type=jnp.float32) + bk_ref[...]
    v = jnp.dot(x_bf, wv_ref[...], preferred_element_type=jnp.float32) + bv_ref[...]
    q_bf = q.astype(jnp.bfloat16)
    k_bf = k.astype(jnp.bfloat16)
    v_bf = v.astype(jnp.bfloat16)

    # --- per-head scaled dot-product attention; ctx written into a
    #     lane-offset VMEM slab so head concat is free ---
    for h in range(num_heads):
        lo = h * depth
        qh = q_bf[:, lo:lo + depth].reshape(bc, seq, depth)
        kh = k_bf[:, lo:lo + depth].reshape(bc, seq, depth)
        vh = v_bf[:, lo:lo + depth].reshape(bc, seq, depth)

        logits = jnp.einsum("bqd,bkd->bqk", qh, kh,
                            preferred_element_type=jnp.float32)   # [bc,S,S]
        logits = logits + neg_mask                                 # mask*-1e9
        m = jnp.max(logits, axis=-1, keepdims=True)
        p = jnp.exp(logits - m)
        denom = jnp.sum(p, axis=-1, keepdims=True)
        ctx = jnp.einsum("bqk,bkd->bqd", p.astype(jnp.bfloat16), vh,
                         preferred_element_type=jnp.float32)       # [bc,S,d]
        ctx = ctx * pl.reciprocal(denom, approx=True)   # 1/l folded in epilogue
        ctx_scr[:, lo:lo + depth] = ctx.reshape(bc * seq, depth)

    # --- single full-width output projection against the unsplit W_o ---
    attn_out = jnp.dot(ctx_scr[...].astype(jnp.bfloat16), wo_ref[...],
                       preferred_element_type=jnp.float32) + bo_ref[...]
    # TODO(synk): dropout / dropout1 / dropout2 are identity (inference).

    # --- residual + LayerNorm 1 (eps=1e-6, as in the PyTorch module) ---
    h1 = x + attn_out
    mu1 = jnp.mean(h1, axis=-1, keepdims=True)
    var1 = jnp.mean((h1 - mu1) ** 2, axis=-1, keepdims=True)
    out1 = (h1 - mu1) * jax.lax.rsqrt(var1 + 1e-6) * g1_ref[...] + be1_ref[...]

    # --- feed-forward (ReLU), bf16 MXU operands, f32 accumulation ---
    ffn = jnp.dot(out1.astype(jnp.bfloat16), w1_ref[...],
                  preferred_element_type=jnp.float32) + b1_ref[...]
    ffn = jnp.maximum(ffn, 0.0)
    ffn = jnp.dot(ffn.astype(jnp.bfloat16), w2_ref[...],
                  preferred_element_type=jnp.float32) + b2_ref[...]

    # --- residual + LayerNorm 2 ---
    h2 = out1 + ffn
    mu2 = jnp.mean(h2, axis=-1, keepdims=True)
    var2 = jnp.mean((h2 - mu2) ** 2, axis=-1, keepdims=True)
    out2 = (h2 - mu2) * jax.lax.rsqrt(var2 + 1e-6) * g2_ref[...] + be2_ref[...]

    out_ref[...] = out2.astype(out_ref.dtype)


# ---------------------------------------------------------------------------
# Wrapper: one pallas_call for the whole stack, grid over (batch chunks, layers).
# ---------------------------------------------------------------------------
def encoder_stack_pallas(x, mask3, stacked, *, num_heads, batch_chunk=1):
    B, S, D = x.shape
    depth = D // num_heads
    L = stacked["wq"].shape[0]
    bc = batch_chunk
    assert B % bc == 0, "batch must be divisible by batch_chunk"
    n_chunks = B // bc

    x2 = x.reshape(B * S, D).astype(jnp.float32)          # fold B into M

    weight_order = ["wq", "bq", "wk", "bk", "wv", "bv",
                    "wo", "bo", "g1", "be1", "w1", "b1", "w2", "b2",
                    "g2", "be2"]
    weight_args = [stacked[name] for name in weight_order]

    def layer_spec(arr):
        nd = arr.ndim
        return pl.BlockSpec(
            (None,) + tuple(arr.shape[1:]),
            lambda b, l, _nd=nd: (l,) + (0,) * (_nd - 1),
        )

    in_specs = [
        pl.BlockSpec((bc * S, D), lambda b, l: (b, 0)),    # x (per batch chunk)
        pl.BlockSpec((bc, 1, S), lambda b, l: (b, 0, 0)),  # padding mask
    ] + [layer_spec(a) for a in weight_args]

    kernel = functools.partial(
        encoder_stack_kernel, bc=bc, seq=S, num_heads=num_heads, depth=depth)

    out2d = pl.pallas_call(
        kernel,
        out_shape=jax.ShapeDtypeStruct((B * S, D), jnp.float32),
        grid_spec=pltpu.PrefetchScalarGridSpec(
            num_scalar_prefetch=0,
            grid=(n_chunks, L),
            in_specs=in_specs,
            # Constant block index across the layer axis -> resident in VMEM,
            # written back to HBM only when the batch chunk changes.
            out_specs=pl.BlockSpec((bc * S, D), lambda b, l: (b, 0)),
            scratch_shapes=[pltpu.VMEM((bc * S, D), jnp.float32)],  # ctx slab
        ),
        compiler_params=pltpu.CompilerParams(
            dimension_semantics=("parallel", "arbitrary"),
            # Above v5e/v6e default scoped limits, below v7x 64 MiB physical.
            vmem_limit_bytes=48 * 1024 * 1024,
        ),
    )(x2, mask3, *weight_args)
    return out2d.reshape(B, S, D)


# ---------------------------------------------------------------------------
# Parameter prep: stack per-layer weights along a leading layer axis.
# Weights stay UNSPLIT and lane-dense; attention scale folded into Wq / bq.
# ---------------------------------------------------------------------------
def stack_encoder_layers(layers, *, num_heads):
    L = len(layers)
    D = layers[0]["wq"].shape[0]
    depth = D // num_heads
    scale = 1.0 / float(np.sqrt(depth))

    def stk(name):
        return jnp.stack([lp[name] for lp in layers], axis=0)

    def mat(name, pre=1.0):                 # [L, a, b] -> bf16 MXU operand
        return (stk(name).astype(jnp.float32) * pre).astype(jnp.bfloat16)

    def vec(name, pre=1.0):                 # [L, w] -> [L, 1, w] f32
        b = stk(name).astype(jnp.float32) * pre
        return b.reshape(L, 1, b.shape[-1])

    return {
        "wq": mat("wq", scale), "bq": vec("bq", scale),   # scale folded here
        "wk": mat("wk"), "bk": vec("bk"),
        "wv": mat("wv"), "bv": vec("bv"),
        "wo": mat("wo"), "bo": vec("bo"),
        "g1": vec("g1"), "be1": vec("be1"),
        "w1": mat("w1"), "b1": vec("b1"),
        "w2": mat("w2"), "b2": vec("b2"),
        "g2": vec("g2"), "be2": vec("be2"),
    }


# ---------------------------------------------------------------------------
# Plain-JAX glue: embedding, positional encoding, padding mask.
# ---------------------------------------------------------------------------
def positional_encoding(position, d_model):
    pos = np.arange(position, dtype=np.float32)[:, None]
    i = np.arange(d_model, dtype=np.float32)[None, :]
    angles = pos / np.power(10000.0, (2.0 * (np.floor(i / 2.0))) / d_model)
    pe = np.zeros((position, d_model), dtype=np.float32)
    pe[:, 0::2] = np.sin(angles[:, 0::2])
    pe[:, 1::2] = np.cos(angles[:, 1::2])
    return jnp.asarray(pe)


def make_padding_mask(token_ids):
    # PyTorch create_padding_mask: [B,1,1,S]; here [B,1,S] (broadcast over q).
    return (token_ids == 0).astype(jnp.float32)[:, None, :]


def init_encoder_params(key, vocab_size, num_layers, dff, d_model):
    keys = jax.random.split(key, 1 + num_layers)
    params = {
        "embedding": jax.random.normal(keys[0], (vocab_size, d_model),
                                       jnp.float32) * 0.02,
        "layers": [],
    }
    for li in range(num_layers):
        lk = jax.random.split(keys[1 + li], 8)
        s = 0.05
        layer = {
            "wq": jax.random.normal(lk[0], (d_model, d_model)) * s,
            "bq": jnp.zeros((d_model,)),
            "wk": jax.random.normal(lk[1], (d_model, d_model)) * s,
            "bk": jnp.zeros((d_model,)),
            "wv": jax.random.normal(lk[2], (d_model, d_model)) * s,
            "bv": jnp.zeros((d_model,)),
            "wo": jax.random.normal(lk[3], (d_model, d_model)) * s,
            "bo": jnp.zeros((d_model,)),
            "g1": jnp.ones((d_model,)),
            "be1": jnp.zeros((d_model,)),
            "w1": jax.random.normal(lk[4], (d_model, dff)) * s,
            "b1": jnp.zeros((dff,)),
            "w2": jax.random.normal(lk[5], (dff, d_model)) * s,
            "b2": jnp.zeros((d_model,)),
            "g2": jnp.ones((d_model,)),
            "be2": jnp.zeros((d_model,)),
        }
        params["layers"].append(jax.tree_util.tree_map(
            lambda a: a.astype(jnp.float32), layer))
    return params


def encoder_forward(token_ids, params, *, d_model, num_heads, pos_enc,
                    batch_chunk=1):
    B, S = token_ids.shape
    # Embedding + sqrt(d_model) scale + positional encoding (glue).
    x = params["embedding"][token_ids] * jnp.sqrt(jnp.float32(d_model))
    x = x + pos_enc[None, :S, :]
    # TODO(synk): Encoder-level nn.Dropout is identity (inference semantics).
    mask3 = make_padding_mask(token_ids)
    stacked = stack_encoder_layers(params["layers"], num_heads=num_heads)
    return encoder_stack_pallas(x, mask3, stacked, num_heads=num_heads,
                                batch_chunk=batch_chunk)


if __name__ == "__main__":
    # Small, deterministic configuration.
    vocab_size = 16      # pos_encoding length == vocab_size (as in the module)
    num_layers = 2
    dff = 64
    d_model = 32
    num_heads = 4
    batch = 2
    seq = 8              # must be <= vocab_size (positional encoding length)

    key = jax.random.PRNGKey(0)
    pkey, dkey = jax.random.split(key)

    params = init_encoder_params(pkey, vocab_size, num_layers, dff, d_model)
    pos_enc = positional_encoding(vocab_size, d_model)

    # Token ids in [0, vocab_size); zeros act as padding (masked out).
    token_ids = jax.random.randint(dkey, (batch, seq), 0, vocab_size,
                                   dtype=jnp.int32)
    token_ids = token_ids.at[:, -2:].set(0)   # force some padding positions

    out = encoder_forward(token_ids, params, d_model=d_model,
                          num_heads=num_heads, pos_enc=pos_enc,
                          batch_chunk=1)      # 2 batch chunks x 2 layers grid
    out = jax.block_until_ready(out)

    assert out.shape == (batch, seq, d_model), out.shape
    assert bool(jnp.all(jnp.isfinite(out)))
    print("KERNEL_OK")
</pallas_src>

<mosaic_0001>
module attributes {stable_mosaic.version = 11 : i64} {
  func.func @encoder_stack_kernel(%arg0: i32, %arg1: i32, %arg2: memref<8x32xf32, #tpu.memory_space<vmem>>, %arg3: memref<1x1x8xf32, #tpu.memory_space<vmem>>, %arg4: memref<1x32x32xbf16, #tpu.memory_space<vmem>>, %arg5: memref<1x1x32xf32, #tpu.memory_space<vmem>>, %arg6: memref<1x32x32xbf16, #tpu.memory_space<vmem>>, %arg7: memref<1x1x32xf32, #tpu.memory_space<vmem>>, %arg8: memref<1x32x32xbf16, #tpu.memory_space<vmem>>, %arg9: memref<1x1x32xf32, #tpu.memory_space<vmem>>, %arg10: memref<1x32x32xbf16, #tpu.memory_space<vmem>>, %arg11: memref<1x1x32xf32, #tpu.memory_space<vmem>>, %arg12: memref<1x1x32xf32, #tpu.memory_space<vmem>>, %arg13: memref<1x1x32xf32, #tpu.memory_space<vmem>>, %arg14: memref<1x32x64xbf16, #tpu.memory_space<vmem>>, %arg15: memref<1x1x64xf32, #tpu.memory_space<vmem>>, %arg16: memref<1x64x32xbf16, #tpu.memory_space<vmem>>, %arg17: memref<1x1x32xf32, #tpu.memory_space<vmem>>, %arg18: memref<1x1x32xf32, #tpu.memory_space<vmem>>, %arg19: memref<1x1x32xf32, #tpu.memory_space<vmem>>, %arg20: memref<8x32xf32, #tpu.memory_space<vmem>>, %arg21: memref<8x32xf32, #tpu.memory_space<vmem>>) attributes {dimension_semantics = [#tpu.dimension_semantics<parallel>, #tpu.dimension_semantics<arbitrary>], iteration_bounds = array<i64: 2, 2>, scalar_prefetch = 0 : i64, scratch_operands = 1 : i64, tpu.core_type = #tpu.core_type<tc>, window_params = [{transform_indices = @transform_0, window_bounds = array<i64: 8, 32>}, {transform_indices = @transform_1, window_bounds = array<i64: 1, 1, 8>}, {transform_indices = @transform_2, window_bounds = array<i64: 1, 32, 32>}, {transform_indices = @transform_3, window_bounds = array<i64: 1, 1, 32>}, {transform_indices = @transform_4, window_bounds = array<i64: 1, 32, 32>}, {transform_indices = @transform_5, window_bounds = array<i64: 1, 1, 32>}, {transform_indices = @transform_6, window_bounds = array<i64: 1, 32, 32>}, {transform_indices = @transform_7, window_bounds = array<i64: 1, 1, 32>}, {transform_indices = @transform_8, window_bounds = array<i64: 1, 32, 32>}, {transform_indices = @transform_9, window_bounds = array<i64: 1, 1, 32>}, {transform_indices = @transform_10, window_bounds = array<i64: 1, 1, 32>}, {transform_indices = @transform_11, window_bounds = array<i64: 1, 1, 32>}, {transform_indices = @transform_12, window_bounds = array<i64: 1, 32, 64>}, {transform_indices = @transform_13, window_bounds = array<i64: 1, 1, 64>}, {transform_indices = @transform_14, window_bounds = array<i64: 1, 64, 32>}, {transform_indices = @transform_15, window_bounds = array<i64: 1, 1, 32>}, {transform_indices = @transform_16, window_bounds = array<i64: 1, 1, 32>}, {transform_indices = @transform_17, window_bounds = array<i64: 1, 1, 32>}, {transform_indices = @transform_18, window_bounds = array<i64: 8, 32>}]} {
    %c0_i32 = arith.constant 0 : i32
    %0 = arith.cmpi eq, %arg1, %c0_i32 : i32
    %1 = arith.extui %0 : i1 to i32
    %c0_i32_0 = arith.constant 0 : i32
    %2 = arith.cmpi ne, %1, %c0_i32_0 : i32
    scf.if %2 {
      %c0_95 = arith.constant 0 : index
      %c0_96 = arith.constant 0 : index
      %206 = vector.load %arg2[%c0_95, %c0_96] : memref<8x32xf32, #tpu.memory_space<vmem>>, vector<8x32xf32>
      %c0_97 = arith.constant 0 : index
      %c0_98 = arith.constant 0 : index
      %207 = vector.load %arg20[%c0_97, %c0_98] : memref<8x32xf32, #tpu.memory_space<vmem>>, vector<8x32xf32>
      tpu.vector_store %arg20[%c0_97, %c0_98], %206 {strides = array<i32>} : memref<8x32xf32, #tpu.memory_space<vmem>>, vector<8x32xf32>,
    } else {
    }
    %c0 = arith.constant 0 : index
    %c0_1 = arith.constant 0 : index
    %3 = vector.load %arg20[%c0, %c0_1] : memref<8x32xf32, #tpu.memory_space<vmem>>, vector<8x32xf32>
    %4 = arith.truncf %3 : vector<8x32xf32> to vector<8x32xbf16>
    %c0_2 = arith.constant 0 : index
    %c0_3 = arith.constant 0 : index
    %c0_4 = arith.constant 0 : index
    %5 = vector.load %arg3[%c0_2, %c0_3, %c0_4] : memref<1x1x8xf32, #tpu.memory_space<vmem>>, vector<1x1x8xf32>
    %cst = arith.constant -1.000000e+09 : f32
    %6 = vector.broadcast %cst : f32 to vector<1x1x8xf32>
    %7 = arith.mulf %5, %6 : vector<1x1x8xf32>
    %c0_5 = arith.constant 0 : index
    %c0_6 = arith.constant 0 : index
    %c0_7 = arith.constant 0 : index
    %8 = vector.load %arg4[%c0_5, %c0_6, %c0_7] : memref<1x32x32xbf16, #tpu.memory_space<vmem>>, vector<1x32x32xbf16>
    %9 = vector.shape_cast %8 : vector<1x32x32xbf16> to vector<32x32xbf16>
    %cst_8 = arith.constant dense<0.000000e+00> : vector<8x32xf32>
    %10 = tpu.matmul %4, %9, %cst_8 {dimension_numbers = #tpu.dot_dimension_numbers<[1], [0], [0], [1], [0, 0, 1, 1], [], []>} : vector<8x32xbf16>, vector<32x32xbf16>, vector<8x32xf32> -> vector<8x32xf32>
    %c0_9 = arith.constant 0 : index
    %c0_10 = arith.constant 0 : index
    %c0_11 = arith.constant 0 : index
    %11 = vector.load %arg5[%c0_9, %c0_10, %c0_11] : memref<1x1x32xf32, #tpu.memory_space<vmem>>, vector<1x1x32xf32>
    %12 = vector.shape_cast %11 : vector<1x1x32xf32> to vector<1x32xf32>
    %13 = vector.broadcast %12 : vector<1x32xf32> to vector<8x32xf32>
    %14 = arith.addf %10, %13 : vector<8x32xf32>
    %c0_12 = arith.constant 0 : index
    %c0_13 = arith.constant 0 : index
    %c0_14 = arith.constant 0 : index
    %15 = vector.load %arg6[%c0_12, %c0_13, %c0_14] : memref<1x32x32xbf16, #tpu.memory_space<vmem>>, vector<1x32x32xbf16>
    %16 = vector.shape_cast %15 : vector<1x32x32xbf16> to vector<32x32xbf16>
    %cst_15 = arith.constant dense<0.000000e+00> : vector<8x32xf32>
    %17 = tpu.matmul %4, %16, %cst_15 {dimension_numbers = #tpu.dot_dimension_numbers<[1], [0], [0], [1], [0, 0, 1, 1], [], []>} : vector<8x32xbf16>, vector<32x32xbf16>, vector<8x32xf32> -> vector<8x32xf32>
    %c0_16 = arith.constant 0 : index
    %c0_17 = arith.constant 0 : index
    %c0_18 = arith.constant 0 : index
    %18 = vector.load %arg7[%c0_16, %c0_17, %c0_18] : memref<1x1x32xf32, #tpu.memory_space<vmem>>, vector<1x1x32xf32>
    %19 = vector.shape_cast %18 : vector<1x1x32xf32> to vector<1x32xf32>
    %20 = vector.broadcast %19 : vector<1x32xf32> to vector<8x32xf32>
    %21 = arith.addf %17, %20 : vector<8x32xf32>
    %c0_19 = arith.constant 0 : index
    %c0_20 = arith.constant 0 : index
    %c0_21 = arith.constant 0 : index
    %22 = vector.load %arg8[%c0_19, %c0_20, %c0_21] : memref<1x32x32xbf16, #tpu.memory_space<vmem>>, vector<1x32x32xbf16>
    %23 = vector.shape_cast %22 : vector<1x32x32xbf16> to vector<32x32xbf16>
    %cst_22 = arith.constant dense<0.000000e+00> : vector<8x32xf32>
    %24 = tpu.matmul %4, %23, %cst_22 {dimension_numbers = #tpu.dot_dimension_numbers<[1], [0], [0], [1], [0, 0, 1, 1], [], []>} : vector<8x32xbf16>, vector<32x32xbf16>, vector<8x32xf32> -> vector<8x32xf32>
    %c0_23 = arith.constant 0 : index
    %c0_24 = arith.constant 0 : index
    %c0_25 = arith.constant 0 : index
    %25 = vector.load %arg9[%c0_23, %c0_24, %c0_25] : memref<1x1x32xf32, #tpu.memory_space<vmem>>, vector<1x1x32xf32>
    %26 = vector.shape_cast %25 : vector<1x1x32xf32> to vector<1x32xf32>
    %27 = vector.broadcast %26 : vector<1x32xf32> to vector<8x32xf32>
    %28 = arith.addf %24, %27 : vector<8x32xf32>
    %29 = arith.truncf %14 : vector<8x32xf32> to vector<8x32xbf16>
    %30 = arith.truncf %21 : vector<8x32xf32> to vector<8x32xbf16>
    %31 = arith.truncf %28 : vector<8x32xf32> to vector<8x32xbf16>
    %32 = vector.extract_strided_slice %29 {offsets = [0, 0], sizes = [8, 8], strides = [1, 1]} : vector<8x32xbf16> to vector<8x8xbf16>
    %33 = vector.shape_cast %32 : vector<8x8xbf16> to vector<1x8x8xbf16>
    %34 = vector.extract_strided_slice %30 {offsets = [0, 0], sizes = [8, 8], strides = [1, 1]} : vector<8x32xbf16> to vector<8x8xbf16>
    %35 = vector.shape_cast %34 : vector<8x8xbf16> to vector<1x8x8xbf16>
    %36 = vector.extract_strided_slice %31 {offsets = [0, 0], sizes = [8, 8], strides = [1, 1]} : vector<8x32xbf16> to vector<8x8xbf16>
    %37 = vector.shape_cast %36 : vector<8x8xbf16> to vector<1x8x8xbf16>
    "tpu.trace_start"() <{level = 10 : i32, message = "bqd,bkd->bqk"}> : () -> ()
    %cst_26 = arith.constant dense<0.000000e+00> : vector<1x8x8xf32>
    %38 = tpu.matmul %33, %35, %cst_26 {dimension_numbers = #tpu.dot_dimension_numbers<[2], [2], [1], [1], [0, 0, 0, 1, 1, 1], [0], [0]>} : vector<1x8x8xbf16>, vector<1x8x8xbf16>, vector<1x8x8xf32> -> vector<1x8x8xf32>
    "tpu.trace_stop"() : () -> ()
    %39 = vector.broadcast %7 : vector<1x1x8xf32> to vector<1x8x8xf32>
    %40 = arith.addf %38, %39 : vector<1x8x8xf32>
    %cst_27 = arith.constant dense<0xFF800000> : vector<1x8xf32>
    %41 = vector.multi_reduction <maximumf>, %40, %cst_27 [2] : vector<1x8x8xf32> to vector<1x8xf32>
    %42 = vector.shape_cast %41 : vector<1x8xf32> to vector<1x8x1xf32>
    %43 = vector.broadcast %42 : vector<1x8x1xf32> to vector<1x8x8xf32>
    %44 = arith.subf %40, %43 : vector<1x8x8xf32>
    %45 = math.exp %44 : vector<1x8x8xf32>
    %cst_28 = arith.constant dense<0.000000e+00> : vector<1x8xf32>
    %46 = vector.multi_reduction <add>, %45, %cst_28 [2] : vector<1x8x8xf32> to vector<1x8xf32>
    %47 = vector.shape_cast %46 : vector<1x8xf32> to vector<1x8x1xf32>
    %48 = arith.truncf %45 : vector<1x8x8xf32> to vector<1x8x8xbf16>
    "tpu.trace_start"() <{level = 10 : i32, message = "bqk,bkd->bqd"}> : () -> ()
    %cst_29 = arith.constant dense<0.000000e+00> : vector<1x8x8xf32>
    %49 = tpu.matmul %48, %37, %cst_29 {dimension_numbers = #tpu.dot_dimension_numbers<[2], [1], [1], [2], [0, 0, 0, 1, 1, 2], [0], [0]>} : vector<1x8x8xbf16>, vector<1x8x8xbf16>, vector<1x8x8xf32> -> vector<1x8x8xf32>
    "tpu.trace_stop"() : () -> ()
    %50 = tpu.reciprocal %47 {approx = true} : vector<1x8x1xf32> -> vector<1x8x1xf32>
    %51 = vector.broadcast %50 : vector<1x8x1xf32> to vector<1x8x8xf32>
    %52 = arith.mulf %49, %51 : vector<1x8x8xf32>
    %53 = vector.shape_cast %52 : vector<1x8x8xf32> to vector<8x8xf32>
    %c0_30 = arith.constant 0 : index
    %c0_31 = arith.constant 0 : index
    %54 = vector.load %arg21[%c0_30, %c0_31] : memref<8x32xf32, #tpu.memory_space<vmem>>, vector<8x8xf32>
    tpu.vector_store %arg21[%c0_30, %c0_31], %53 {strides = array<i32>} : memref<8x32xf32, #tpu.memory_space<vmem>>, vector<8x8xf32>,
    %55 = vector.extract_strided_slice %29 {offsets = [0, 8], sizes = [8, 8], strides = [1, 1]} : vector<8x32xbf16> to vector<8x8xbf16>
    %56 = vector.shape_cast %55 : vector<8x8xbf16> to vector<1x8x8xbf16>
    %57 = vector.extract_strided_slice %30 {offsets = [0, 8], sizes = [8, 8], strides = [1, 1]} : vector<8x32xbf16> to vector<8x8xbf16>
    %58 = vector.shape_cast %57 : vector<8x8xbf16> to vector<1x8x8xbf16>
    %59 = vector.extract_strided_slice %31 {offsets = [0, 8], sizes = [8, 8], strides = [1, 1]} : vector<8x32xbf16> to vector<8x8xbf16>
    %60 = vector.shape_cast %59 : vector<8x8xbf16> to vector<1x8x8xbf16>
    "tpu.trace_start"() <{level = 10 : i32, message = "bqd,bkd->bqk"}> : () -> ()
    %cst_32 = arith.constant dense<0.000000e+00> : vector<1x8x8xf32>
    %61 = tpu.matmul %56, %58, %cst_32 {dimension_numbers = #tpu.dot_dimension_numbers<[2], [2], [1], [1], [0, 0, 0, 1, 1, 1], [0], [0]>} : vector<1x8x8xbf16>, vector<1x8x8xbf16>, vector<1x8x8xf32> -> vector<1x8x8xf32>
    "tpu.trace_stop"() : () -> ()
    %62 = vector.broadcast %7 : vector<1x1x8xf32> to vector<1x8x8xf32>
    %63 = arith.addf %61, %62 : vector<1x8x8xf32>
    %cst_33 = arith.constant dense<0xFF800000> : vector<1x8xf32>
    %64 = vector.multi_reduction <maximumf>, %63, %cst_33 [2] : vector<1x8x8xf32> to vector<1x8xf32>
    %65 = vector.shape_cast %64 : vector<1x8xf32> to vector<1x8x1xf32>
    %66 = vector.broadcast %65 : vector<1x8x1xf32> to vector<1x8x8xf32>
    %67 = arith.subf %63, %66 : vector<1x8x8xf32>
    %68 = math.exp %67 : vector<1x8x8xf32>
    %cst_34 = arith.constant dense<0.000000e+00> : vector<1x8xf32>
    %69 = vector.multi_reduction <add>, %68, %cst_34 [2] : vector<1x8x8xf32> to vector<1x8xf32>
    %70 = vector.shape_cast %69 : vector<1x8xf32> to vector<1x8x1xf32>
    %71 = arith.truncf %68 : vector<1x8x8xf32> to vector<1x8x8xbf16>
    "tpu.trace_start"() <{level = 10 : i32, message = "bqk,bkd->bqd"}> : () -> ()
    %cst_35 = arith.constant dense<0.000000e+00> : vector<1x8x8xf32>
    %72 = tpu.matmul %71, %60, %cst_35 {dimension_numbers = #tpu.dot_dimension_numbers<[2], [1], [1], [2], [0, 0, 0, 1, 1, 2], [0], [0]>} : vector<1x8x8xbf16>, vector<1x8x8xbf16>, vector<1x8x8xf32> -> vector<1x8x8xf32>
    "tpu.trace_stop"() : () -> ()
    %73 = tpu.reciprocal %70 {approx = true} : vector<1x8x1xf32> -> vector<1x8x1xf32>
    %74 = vector.broadcast %73 : vector<1x8x1xf32> to vector<1x8x8xf32>
    %75 = arith.mulf %72, %74 : vector<1x8x8xf32>
    %76 = vector.shape_cast %75 : vector<1x8x8xf32> to vector<8x8xf32>
    %c0_36 = arith.constant 0 : index
    %c8 = arith.constant 8 : index
    %77 = vector.load %arg21[%c0_36, %c8] : memref<8x32xf32, #tpu.memory_space<vmem>>, vector<8x8xf32>
    tpu.vector_store %arg21[%c0_36, %c8], %76 {strides = array<i32>} : memref<8x32xf32, #tpu.memory_space<vmem>>, vector<8x8xf32>,
    %78 = vector.extract_strided_slice %29 {offsets = [0, 16], sizes = [8, 8], strides = [1, 1]} : vector<8x32xbf16> to vector<8x8xbf16>
    %79 = vector.shape_cast %78 : vector<8x8xbf16> to vector<1x8x8xbf16>
    %80 = vector.extract_strided_slice %30 {offsets = [0, 16], sizes = [8, 8], strides = [1, 1]} : vector<8x32xbf16> to vector<8x8xbf16>
    %81 = vector.shape_cast %80 : vector<8x8xbf16> to vector<1x8x8xbf16>
    %82 = vector.extract_strided_slice %31 {offsets = [0, 16], sizes = [8, 8], strides = [1, 1]} : vector<8x32xbf16> to vector<8x8xbf16>
    %83 = vector.shape_cast %82 : vector<8x8xbf16> to vector<1x8x8xbf16>
    "tpu.trace_start"() <{level = 10 : i32, message = "bqd,bkd->bqk"}> : () -> ()
    %cst_37 = arith.constant dense<0.000000e+00> : vector<1x8x8xf32>
    %84 = tpu.matmul %79, %81, %cst_37 {dimension_numbers = #tpu.dot_dimension_numbers<[2], [2], [1], [1], [0, 0, 0, 1, 1, 1], [0], [0]>} : vector<1x8x8xbf16>, vector<1x8x8xbf16>, vector<1x8x8xf32> -> vector<1x8x8xf32>
    "tpu.trace_stop"() : () -> ()
    %85 = vector.broadcast %7 : vector<1x1x8xf32> to vector<1x8x8xf32>
    %86 = arith.addf %84, %85 : vector<1x8x8xf32>
    %cst_38 = arith.constant dense<0xFF800000> : vector<1x8xf32>
    %87 = vector.multi_reduction <maximumf>, %86, %cst_38 [2] : vector<1x8x8xf32> to vector<1x8xf32>
    %88 = vector.shape_cast %87 : vector<1x8xf32> to vector<1x8x1xf32>
    %89 = vector.broadcast %88 : vector<1x8x1xf32> to vector<1x8x8xf32>
    %90 = arith.subf %86, %89 : vector<1x8x8xf32>
    %91 = math.exp %90 : vector<1x8x8xf32>
    %cst_39 = arith.constant dense<0.000000e+00> : vector<1x8xf32>
    %92 = vector.multi_reduction <add>, %91, %cst_39 [2] : vector<1x8x8xf32> to vector<1x8xf32>
    %93 = vector.shape_cast %92 : vector<1x8xf32> to vector<1x8x1xf32>
    %94 = arith.truncf %91 : vector<1x8x8xf32> to vector<1x8x8xbf16>
    "tpu.trace_start"() <{level = 10 : i32, message = "bqk,bkd->bqd"}> : () -> ()
    %cst_40 = arith.constant dense<0.000000e+00> : vector<1x8x8xf32>
    %95 = tpu.matmul %94, %83, %cst_40 {dimension_numbers = #tpu.dot_dimension_numbers<[2], [1], [1], [2], [0, 0, 0, 1, 1, 2], [0], [0]>} : vector<1x8x8xbf16>, vector<1x8x8xbf16>, vector<1x8x8xf32> -> vector<1x8x8xf32>
    "tpu.trace_stop"() : () -> ()
    %96 = tpu.reciprocal %93 {approx = true} : vector<1x8x1xf32> -> vector<1x8x1xf32>
    %97 = vector.broadcast %96 : vector<1x8x1xf32> to vector<1x8x8xf32>
    %98 = arith.mulf %95, %97 : vector<1x8x8xf32>
    %99 = vector.shape_cast %98 : vector<1x8x8xf32> to vector<8x8xf32>
    %c0_41 = arith.constant 0 : index
    %c16 = arith.constant 16 : index
    %100 = vector.load %arg21[%c0_41, %c16] : memref<8x32xf32, #tpu.memory_space<vmem>>, vector<8x8xf32>
    tpu.vector_store %arg21[%c0_41, %c16], %99 {strides = array<i32>} : memref<8x32xf32, #tpu.memory_space<vmem>>, vector<8x8xf32>,
    %101 = vector.extract_strided_slice %29 {offsets = [0, 24], sizes = [8, 8], strides = [1, 1]} : vector<8x32xbf16> to vector<8x8xbf16>
    %102 = vector.shape_cast %101 : vector<8x8xbf16> to vector<1x8x8xbf16>
    %103 = vector.extract_strided_slice %30 {offsets = [0, 24], sizes = [8, 8], strides = [1, 1]} : vector<8x32xbf16> to vector<8x8xbf16>
    %104 = vector.shape_cast %103 : vector<8x8xbf16> to vector<1x8x8xbf16>
    %105 = vector.extract_strided_slice %31 {offsets = [0, 24], sizes = [8, 8], strides = [1, 1]} : vector<8x32xbf16> to vector<8x8xbf16>
    %106 = vector.shape_cast %105 : vector<8x8xbf16> to vector<1x8x8xbf16>
    "tpu.trace_start"() <{level = 10 : i32, message = "bqd,bkd->bqk"}> : () -> ()
    %cst_42 = arith.constant dense<0.000000e+00> : vector<1x8x8xf32>
    %107 = tpu.matmul %102, %104, %cst_42 {dimension_numbers = #tpu.dot_dimension_numbers<[2], [2], [1], [1], [0, 0, 0, 1, 1, 1], [0], [0]>} : vector<1x8x8xbf16>, vector<1x8x8xbf16>, vector<1x8x8xf32> -> vector<1x8x8xf32>
    "tpu.trace_stop"() : () -> ()
    %108 = vector.broadcast %7 : vector<1x1x8xf32> to vector<1x8x8xf32>
    %109 = arith.addf %107, %108 : vector<1x8x8xf32>
    %cst_43 = arith.constant dense<0xFF800000> : vector<1x8xf32>
    %110 = vector.multi_reduction <maximumf>, %109, %cst_43 [2] : vector<1x8x8xf32> to vector<1x8xf32>
    %111 = vector.shape_cast %110 : vector<1x8xf32> to vector<1x8x1xf32>
    %112 = vector.broadcast %111 : vector<1x8x1xf32> to vector<1x8x8xf32>
    %113 = arith.subf %109, %112 : vector<1x8x8xf32>
    %114 = math.exp %113 : vector<1x8x8xf32>
    %cst_44 = arith.constant dense<0.000000e+00> : vector<1x8xf32>
    %115 = vector.multi_reduction <add>, %114, %cst_44 [2] : vector<1x8x8xf32> to vector<1x8xf32>
    %116 = vector.shape_cast %115 : vector<1x8xf32> to vector<1x8x1xf32>
    %117 = arith.truncf %114 : vector<1x8x8xf32> to vector<1x8x8xbf16>
    "tpu.trace_start"() <{level = 10 : i32, message = "bqk,bkd->bqd"}> : () -> ()
    %cst_45 = arith.constant dense<0.000000e+00> : vector<1x8x8xf32>
    %118 = tpu.matmul %117, %106, %cst_45 {dimension_numbers = #tpu.dot_dimension_numbers<[2], [1], [1], [2], [0, 0, 0, 1, 1, 2], [0], [0]>} : vector<1x8x8xbf16>, vector<1x8x8xbf16>, vector<1x8x8xf32> -> vector<1x8x8xf32>
    "tpu.trace_stop"() : () -> ()
    %119 = tpu.reciprocal %116 {approx = true} : vector<1x8x1xf32> -> vector<1x8x1xf32>
    %120 = vector.broadcast %119 : vector<1x8x1xf32> to vector<1x8x8xf32>
    %121 = arith.mulf %118, %120 : vector<1x8x8xf32>
    %122 = vector.shape_cast %121 : vector<1x8x8xf32> to vector<8x8xf32>
    %c0_46 = arith.constant 0 : index
    %c24 = arith.constant 24 : index
    %123 = vector.load %arg21[%c0_46, %c24] : memref<8x32xf32, #tpu.memory_space<vmem>>, vector<8x8xf32>
    tpu.vector_store %arg21[%c0_46, %c24], %122 {strides = array<i32>} : memref<8x32xf32, #tpu.memory_space<vmem>>, vector<8x8xf32>,
    %c0_47 = arith.constant 0 : index
    %c0_48 = arith.constant 0 : index
    %124 = vector.load %arg21[%c0_47, %c0_48] : memref<8x32xf32, #tpu.memory_space<vmem>>, vector<8x32xf32>
    %125 = arith.truncf %124 : vector<8x32xf32> to vector<8x32xbf16>
    %c0_49 = arith.constant 0 : index
    %c0_50 = arith.constant 0 : index
    %c0_51 = arith.constant 0 : index
    %126 = vector.load %arg10[%c0_49, %c0_50, %c0_51] : memref<1x32x32xbf16, #tpu.memory_space<vmem>>, vector<1x32x32xbf16>
    %127 = vector.shape_cast %126 : vector<1x32x32xbf16> to vector<32x32xbf16>
    %cst_52 = arith.constant dense<0.000000e+00> : vector<8x32xf32>
    %128 = tpu.matmul %125, %127, %cst_52 {dimension_numbers = #tpu.dot_dimension_numbers<[1], [0], [0], [1], [0, 0, 1, 1], [], []>} : vector<8x32xbf16>, vector<32x32xbf16>, vector<8x32xf32> -> vector<8x32xf32>
    %c0_53 = arith.constant 0 : index
    %c0_54 = arith.constant 0 : index
    %c0_55 = arith.constant 0 : index
    %129 = vector.load %arg11[%c0_53, %c0_54, %c0_55] : memref<1x1x32xf32, #tpu.memory_space<vmem>>, vector<1x1x32xf32>
    %130 = vector.shape_cast %129 : vector<1x1x32xf32> to vector<1x32xf32>
    %131 = vector.broadcast %130 : vector<1x32xf32> to vector<8x32xf32>
    %132 = arith.addf %128, %131 : vector<8x32xf32>
    %133 = arith.addf %3, %132 : vector<8x32xf32>
    %cst_56 = arith.constant dense<0.000000e+00> : vector<8xf32>
    %134 = vector.multi_reduction <add>, %133, %cst_56 [1] : vector<8x32xf32> to vector<8xf32>
    %135 = vector.shape_cast %134 : vector<8xf32> to vector<8x1xf32>
    %cst_57 = arith.constant 3.200000e+01 : f32
    %136 = vector.broadcast %cst_57 : f32 to vector<8x1xf32>
    %137 = arith.divf %135, %136 : vector<8x1xf32>
    %138 = vector.broadcast %137 : vector<8x1xf32> to vector<8x32xf32>
    %139 = arith.subf %133, %138 : vector<8x32xf32>
    %140 = arith.mulf %139, %139 : vector<8x32xf32>
    %cst_58 = arith.constant dense<0.000000e+00> : vector<8xf32>
    %141 = vector.multi_reduction <add>, %140, %cst_58 [1] : vector<8x32xf32> to vector<8xf32>
    %142 = vector.shape_cast %141 : vector<8xf32> to vector<8x1xf32>
    %cst_59 = arith.constant 3.200000e+01 : f32
    %143 = vector.broadcast %cst_59 : f32 to vector<8x1xf32>
    %144 = arith.divf %142, %143 : vector<8x1xf32>
    %145 = vector.broadcast %137 : vector<8x1xf32> to vector<8x32xf32>
    %146 = arith.subf %133, %145 : vector<8x32xf32>
    %cst_60 = arith.constant 9.99999997E-7 : f32
    %147 = vector.broadcast %cst_60 : f32 to vector<8x1xf32>
    %148 = arith.addf %144, %147 : vector<8x1xf32>
    %149 = math.rsqrt %148 : vector<8x1xf32>
    %150 = vector.broadcast %149 : vector<8x1xf32> to vector<8x32xf32>
    %151 = arith.mulf %146, %150 : vector<8x32xf32>
    %c0_61 = arith.constant 0 : index
    %c0_62 = arith.constant 0 : index
    %c0_63 = arith.constant 0 : index
    %152 = vector.load %arg12[%c0_61, %c0_62, %c0_63] : memref<1x1x32xf32, #tpu.memory_space<vmem>>, vector<1x1x32xf32>
    %153 = vector.shape_cast %152 : vector<1x1x32xf32> to vector<1x32xf32>
    %154 = vector.broadcast %153 : vector<1x32xf32> to vector<8x32xf32>
    %155 = arith.mulf %151, %154 : vector<8x32xf32>
    %c0_64 = arith.constant 0 : index
    %c0_65 = arith.constant 0 : index
    %c0_66 = arith.constant 0 : index
    %156 = vector.load %arg13[%c0_64, %c0_65, %c0_66] : memref<1x1x32xf32, #tpu.memory_space<vmem>>, vector<1x1x32xf32>
    %157 = vector.shape_cast %156 : vector<1x1x32xf32> to vector<1x32xf32>
    %158 = vector.broadcast %157 : vector<1x32xf32> to vector<8x32xf32>
    %159 = arith.addf %155, %158 : vector<8x32xf32>
    %160 = arith.truncf %159 : vector<8x32xf32> to vector<8x32xbf16>
    %c0_67 = arith.constant 0 : index
    %c0_68 = arith.constant 0 : index
    %c0_69 = arith.constant 0 : index
    %161 = vector.load %arg14[%c0_67, %c0_68, %c0_69] : memref<1x32x64xbf16, #tpu.memory_space<vmem>>, vector<1x32x64xbf16>
    %162 = vector.shape_cast %161 : vector<1x32x64xbf16> to vector<32x64xbf16>
    %cst_70 = arith.constant dense<0.000000e+00> : vector<8x64xf32>
    %163 = tpu.matmul %160, %162, %cst_70 {dimension_numbers = #tpu.dot_dimension_numbers<[1], [0], [0], [1], [0, 0, 1, 1], [], []>} : vector<8x32xbf16>, vector<32x64xbf16>, vector<8x64xf32> -> vector<8x64xf32>
    %c0_71 = arith.constant 0 : index
    %c0_72 = arith.constant 0 : index
    %c0_73 = arith.constant 0 : index
    %164 = vector.load %arg15[%c0_71, %c0_72, %c0_73] : memref<1x1x64xf32, #tpu.memory_space<vmem>>, vector<1x1x64xf32>
    %165 = vector.shape_cast %164 : vector<1x1x64xf32> to vector<1x64xf32>
    %166 = vector.broadcast %165 : vector<1x64xf32> to vector<8x64xf32>
    %167 = arith.addf %163, %166 : vector<8x64xf32>
    %cst_74 = arith.constant 0.000000e+00 : f32
    %168 = vector.broadcast %cst_74 : f32 to vector<8x64xf32>
    %169 = arith.maximumf %167, %168 : vector<8x64xf32>
    %170 = arith.truncf %169 : vector<8x64xf32> to vector<8x64xbf16>
    %c0_75 = arith.constant 0 : index
    %c0_76 = arith.constant 0 : index
    %c0_77 = arith.constant 0 : index
    %171 = vector.load %arg16[%c0_75, %c0_76, %c0_77] : memref<1x64x32xbf16, #tpu.memory_space<vmem>>, vector<1x64x32xbf16>
    %172 = vector.shape_cast %171 : vector<1x64x32xbf16> to vector<64x32xbf16>
    %cst_78 = arith.constant dense<0.000000e+00> : vector<8x32xf32>
    %173 = tpu.matmul %170, %172, %cst_78 {dimension_numbers = #tpu.dot_dimension_numbers<[1], [0], [0], [1], [0, 0, 1, 1], [], []>} : vector<8x64xbf16>, vector<64x32xbf16>, vector<8x32xf32> -> vector<8x32xf32>
    %c0_79 = arith.constant 0 : index
    %c0_80 = arith.constant 0 : index
    %c0_81 = arith.constant 0 : index
    %174 = vector.load %arg17[%c0_79, %c0_80, %c0_81] : memref<1x1x32xf32, #tpu.memory_space<vmem>>, vector<1x1x32xf32>
    %175 = vector.shape_cast %174 : vector<1x1x32xf32> to vector<1x32xf32>
    %176 = vector.broadcast %175 : vector<1x32xf32> to vector<8x32xf32>
    %177 = arith.addf %173, %176 : vector<8x32xf32>
    %178 = arith.addf %159, %177 : vector<8x32xf32>
    %cst_82 = arith.constant dense<0.000000e+00> : vector<8xf32>
    %179 = vector.multi_reduction <add>, %178, %cst_82 [1] : vector<8x32xf32> to vector<8xf32>
    %180 = vector.shape_cast %179 : vector<8xf32> to vector<8x1xf32>
    %cst_83 = arith.constant 3.200000e+01 : f32
    %181 = vector.broadcast %cst_83 : f32 to vector<8x1xf32>
    %182 = arith.divf %180, %181 : vector<8x1xf32>
    %183 = vector.broadcast %182 : vector<8x1xf32> to vector<8x32xf32>
    %184 = arith.subf %178, %183 : vector<8x32xf32>
    %185 = arith.mulf %184, %184 : vector<8x32xf32>
    %cst_84 = arith.constant dense<0.000000e+00> : vector<8xf32>
    %186 = vector.multi_reduction <add>, %185, %cst_84 [1] : vector<8x32xf32> to vector<8xf32>
    %187 = vector.shape_cast %186 : vector<8xf32> to vector<8x1xf32>
    %cst_85 = arith.constant 3.200000e+01 : f32
    %188 = vector.broadcast %cst_85 : f32 to vector<8x1xf32>
    %189 = arith.divf %187, %188 : vector<8x1xf32>
    %190 = vector.broadcast %182 : vector<8x1xf32> to vector<8x32xf32>
    %191 = arith.subf %178, %190 : vector<8x32xf32>
    %cst_86 = arith.constant 9.99999997E-7 : f32
    %192 = vector.broadcast %cst_86 : f32 to vector<8x1xf32>
    %193 = arith.addf %189, %192 : vector<8x1xf32>
    %194 = math.rsqrt %193 : vector<8x1xf32>
    %195 = vector.broadcast %194 : vector<8x1xf32> to vector<8x32xf32>
    %196 = arith.mulf %191, %195 : vector<8x32xf32>
    %c0_87 = arith.constant 0 : index
    %c0_88 = arith.constant 0 : index
    %c0_89 = arith.constant 0 : index
    %197 = vector.load %arg18[%c0_87, %c0_88, %c0_89] : memref<1x1x32xf32, #tpu.memory_space<vmem>>, vector<1x1x32xf32>
    %198 = vector.shape_cast %197 : vector<1x1x32xf32> to vector<1x32xf32>
    %199 = vector.broadcast %198 : vector<1x32xf32> to vector<8x32xf32>
    %200 = arith.mulf %196, %199 : vector<8x32xf32>
    %c0_90 = arith.constant 0 : index
    %c0_91 = arith.constant 0 : index
    %c0_92 = arith.constant 0 : index
    %201 = vector.load %arg19[%c0_90, %c0_91, %c0_92] : memref<1x1x32xf32, #tpu.memory_space<vmem>>, vector<1x1x32xf32>
    %202 = vector.shape_cast %201 : vector<1x1x32xf32> to vector<1x32xf32>
    %203 = vector.broadcast %202 : vector<1x32xf32> to vector<8x32xf32>
    %204 = arith.addf %200, %203 : vector<8x32xf32>
    %c0_93 = arith.constant 0 : index
    %c0_94 = arith.constant 0 : index
    %205 = vector.load %arg20[%c0_93, %c0_94] : memref<8x32xf32, #tpu.memory_space<vmem>>, vector<8x32xf32>
    tpu.vector_store %arg20[%c0_93, %c0_94], %204 {strides = array<i32>} : memref<8x32xf32, #tpu.memory_space<vmem>>, vector<8x32xf32>,
    return
  }
  func.func @transform_0(%arg0: i32, %arg1: i32) -> (i32, i32) {
    %c0_i32 = arith.constant 0 : i32
    %c0_i32_0 = arith.constant 0 : i32
    return %arg0, %c0_i32 : i32, i32
  }
  func.func @transform_1(%arg0: i32, %arg1: i32) -> (i32, i32, i32) {
    %c0_i32 = arith.constant 0 : i32
    %c0_i32_0 = arith.constant 0 : i32
    %c0_i32_1 = arith.constant 0 : i32
    return %arg0, %c0_i32, %c0_i32_0 : i32, i32, i32
  }
  func.func @transform_2(%arg0: i32, %arg1: i32) -> (i32, i32, i32) {
    %c0_i32 = arith.constant 0 : i32
    %c0_i32_0 = arith.constant 0 : i32
    %c0_i32_1 = arith.constant 0 : i32
    return %arg1, %c0_i32, %c0_i32_0 : i32, i32, i32
  }
  func.func @transform_3(%arg0: i32, %arg1: i32) -> (i32, i32, i32) {
    %c0_i32 = arith.constant 0 : i32
    %c0_i32_0 = arith.constant 0 : i32
    %c0_i32_1 = arith.constant 0 : i32
    return %arg1, %c0_i32, %c0_i32_0 : i32, i32, i32
  }
  func.func @transform_4(%arg0: i32, %arg1: i32) -> (i32, i32, i32) {
    %c0_i32 = arith.constant 0 : i32
    %c0_i32_0 = arith.constant 0 : i32
    %c0_i32_1 = arith.constant 0 : i32
    return %arg1, %c0_i32, %c0_i32_0 : i32, i32, i32
  }
  func.func @transform_5(%arg0: i32, %arg1: i32) -> (i32, i32, i32) {
    %c0_i32 = arith.constant 0 : i32
    %c0_i32_0 = arith.constant 0 : i32
    %c0_i32_1 = arith.constant 0 : i32
    return %arg1, %c0_i32, %c0_i32_0 : i32, i32, i32
  }
  func.func @transform_6(%arg0: i32, %arg1: i32) -> (i32, i32, i32) {
    %c0_i32 = arith.constant 0 : i32
    %c0_i32_0 = arith.constant 0 : i32
    %c0_i32_1 = arith.constant 0 : i32
    return %arg1, %c0_i32, %c0_i32_0 : i32, i32, i32
  }
  func.func @transform_7(%arg0: i32, %arg1: i32) -> (i32, i32, i32) {
    %c0_i32 = arith.constant 0 : i32
    %c0_i32_0 = arith.constant 0 : i32
    %c0_i32_1 = arith.constant 0 : i32
    return %arg1, %c0_i32, %c0_i32_0 : i32, i32, i32
  }
  func.func @transform_8(%arg0: i32, %arg1: i32) -> (i32, i32, i32) {
    %c0_i32 = arith.constant 0 : i32
    %c0_i32_0 = arith.constant 0 : i32
    %c0_i32_1 = arith.constant 0 : i32
    return %arg1, %c0_i32, %c0_i32_0 : i32, i32, i32
  }
  func.func @transform_9(%arg0: i32, %arg1: i32) -> (i32, i32, i32) {
    %c0_i32 = arith.constant 0 : i32
    %c0_i32_0 = arith.constant 0 : i32
    %c0_i32_1 = arith.constant 0 : i32
    return %arg1, %c0_i32, %c0_i32_0 : i32, i32, i32
  }
  func.func @transform_10(%arg0: i32, %arg1: i32) -> (i32, i32, i32) {
    %c0_i32 = arith.constant 0 : i32
    %c0_i32_0 = arith.constant 0 : i32
    %c0_i32_1 = arith.constant 0 : i32
    return %arg1, %c0_i32, %c0_i32_0 : i32, i32, i32
  }
  func.func @transform_11(%arg0: i32, %arg1: i32) -> (i32, i32, i32) {
    %c0_i32 = arith.constant 0 : i32
    %c0_i32_0 = arith.constant 0 : i32
    %c0_i32_1 = arith.constant 0 : i32
    return %arg1, %c0_i32, %c0_i32_0 : i32, i32, i32
  }
  func.func @transform_12(%arg0: i32, %arg1: i32) -> (i32, i32, i32) {
    %c0_i32 = arith.constant 0 : i32
    %c0_i32_0 = arith.constant 0 : i32
    %c0_i32_1 = arith.constant 0 : i32
    return %arg1, %c0_i32, %c0_i32_0 : i32, i32, i32
  }
  func.func @transform_13(%arg0: i32, %arg1: i32) -> (i32, i32, i32) {
    %c0_i32 = arith.constant 0 : i32
    %c0_i32_0 = arith.constant 0 : i32
    %c0_i32_1 = arith.constant 0 : i32
    return %arg1, %c0_i32, %c0_i32_0 : i32, i32, i32
  }
  func.func @transform_14(%arg0: i32, %arg1: i32) -> (i32, i32, i32) {
    %c0_i32 = arith.constant 0 : i32
    %c0_i32_0 = arith.constant 0 : i32
    %c0_i32_1 = arith.constant 0 : i32
    return %arg1, %c0_i32, %c0_i32_0 : i32, i32, i32
  }
  func.func @transform_15(%arg0: i32, %arg1: i32) -> (i32, i32, i32) {
    %c0_i32 = arith.constant 0 : i32
    %c0_i32_0 = arith.constant 0 : i32
    %c0_i32_1 = arith.constant 0 : i32
    return %arg1, %c0_i32, %c0_i32_0 : i32, i32, i32
  }
  func.func @transform_16(%arg0: i32, %arg1: i32) -> (i32, i32, i32) {
    %c0_i32 = arith.constant 0 : i32
    %c0_i32_0 = arith.constant 0 : i32
    %c0_i32_1 = arith.constant 0 : i32
    return %arg1, %c0_i32, %c0_i32_0 : i32, i32, i32
  }
  func.func @transform_17(%arg0: i32, %arg1: i32) -> (i32, i32, i32) {
    %c0_i32 = arith.constant 0 : i32
    %c0_i32_0 = arith.constant 0 : i32
    %c0_i32_1 = arith.constant 0 : i32
    return %arg1, %c0_i32, %c0_i32_0 : i32, i32, i32
  }
  func.func @transform_18(%arg0: i32, %arg1: i32) -> (i32, i32) {
    %c0_i32 = arith.constant 0 : i32
    %c0_i32_0 = arith.constant 0 : i32
    return %arg0, %c0_i32 : i32, i32
  }
}

</mosaic_0001>

<llo_original>
// kernel: tpu_custom_call.1
$region0: #{tpu_custom_call.1}
  #allocation0 [shape = 'u32[]', space=smem, size = 0x4, offset = 0x4, fixed_abs, tag = 'smem constant byte address 0x4 - core index']
  #allocation1 [shape = 'u32[72,128]{1,0:T(1,128)}', space=vmem, size = 0x9000, scoped, tag = 'internal scratch']
  #allocation2 [shape = 'f32[8,32]{1,0:T(8,128)}', space=vmem, size = 0x1000, scoped, tag = 'scratch operand']
  %s0 = inlined_call_operand.hbm [shape: f32[16,32], index: 0, kind: input, shape index: {}]
  %s1 = inlined_call_operand.hbm [shape: f32[2,1,8], index: 1, kind: input, shape index: {}]
  %s2 = inlined_call_operand.vmem [shape: bf16[2,32,32], index: 2, kind: input, shape index: {}]
  %s3 = inlined_call_operand.hbm [shape: f32[2,1,32], index: 3, kind: input, shape index: {}]
  %s4 = inlined_call_operand.vmem [shape: bf16[2,32,32], index: 4, kind: input, shape index: {}]
  %s5 = inlined_call_operand.vmem [shape: f32[2,1,32], index: 5, kind: input, shape index: {}]
  %s6 = inlined_call_operand.vmem [shape: bf16[2,32,32], index: 6, kind: input, shape index: {}]
  %s7 = inlined_call_operand.vmem [shape: f32[2,1,32], index: 7, kind: input, shape index: {}]
  %s8 = inlined_call_operand.hbm [shape: bf16[2,32,32], index: 8, kind: input, shape index: {}]
  %s9 = inlined_call_operand.vmem [shape: f32[2,1,32], index: 9, kind: input, shape index: {}]
  %s10 = inlined_call_operand.vmem [shape: f32[2,1,32], index: 10, kind: input, shape index: {}]
  %s11 = inlined_call_operand.hbm [shape: f32[2,1,32], index: 11, kind: input, shape index: {}]
  %s12 = inlined_call_operand.hbm [shape: bf16[2,32,64], index: 12, kind: input, shape index: {}]
  %s13 = inlined_call_operand.vmem [shape: f32[2,1,64], index: 13, kind: input, shape index: {}]
  %s14 = inlined_call_operand.vmem [shape: bf16[2,64,32], index: 14, kind: input, shape index: {}]
  %s15 = inlined_call_operand.vmem [shape: f32[2,1,32], index: 15, kind: input, shape index: {}]
  %s16 = inlined_call_operand.vmem [shape: f32[2,1,32], index: 16, kind: input, shape index: {}]
  %s17 = inlined_call_operand.hbm [shape: f32[2,1,32], index: 17, kind: input, shape index: {}]
  %s18 = inlined_call_operand.hbm [shape: f32[16,32], index: 18, kind: output, shape index: {}]
  %s19 = sld [smem:[#allocation0]]
  $region137: #{tpu_custom_call.1} parent=0
    _
  %s21 = ssub.s32 1, %s19
  %s22 = scalar_select 0, %s21, %s19
  $region1: #{tpu_custom_call.1} parent=0
    #allocation3 [shape = 'u8[8192]{0}', space=vmem, size = 0x2000, scoped, tag = 'input window, operand 0']
    #allocation4 [shape = 's32[2]{0}', space=sflag, size = 0x8, scoped, tag = 'scoped memory for tpu_custom_call.1']
    #allocation5 [shape = 's32[2]{0}', space=sflag, size = 0x8, scoped, tag = 'scoped memory for tpu_custom_call.1']
    #allocation6 [shape = 'u8[1024]{0}', space=vmem, size = 0x400, scoped, tag = 'input window, operand 1']
    #allocation7 [shape = 's32[2]{0}', space=sflag, size = 0x8, scoped, tag = 'scoped memory for tpu_custom_call.1']
    #allocation8 [shape = 'u8[1024]{0}', space=vmem, size = 0x400, scoped, tag = 'input window, operand 3']
    #allocation9 [shape = 'u8[16384]{0}', space=vmem, size = 0x4000, scoped, tag = 'input window, operand 8']
    #allocation10 [shape = 's32[2]{0}', space=sflag, size = 0x8, scoped, tag = 'scoped memory for tpu_custom_call.1']
    #allocation11 [shape = 'u8[1024]{0}', space=vmem, size = 0x400, scoped, tag = 'input window, operand 11']
    #allocation12 [shape = 'u8[16384]{0}', space=vmem, size = 0x4000, scoped, tag = 'input window, operand 12']
    #allocation13 [shape = 's32[2]{0}', space=sflag, size = 0x8, scoped, tag = 'scoped memory for tpu_custom_call.1']
    #allocation14 [shape = 'u8[1024]{0}', space=vmem, size = 0x400, scoped, tag = 'input window, operand 17']
    #allocation15 [shape = 'u8[8192]{0}', space=vmem, size = 0x2000, scoped, tag = 'output window, operand 0']
    %23 = vsyncpa [#allocation4], 0
    %s24 = scalar_lea.sflag [#allocation4], 1
    %25 = vsyncpa %s24, 0
    %26 = vsyncpa [#allocation7], 0
    %s27 = scalar_lea.sflag [#allocation7], 1
    %28 = vsyncpa %s27, 0
    %29 = vsyncpa [#allocation10], 0
    %s30 = scalar_lea.sflag [#allocation10], 1
    %31 = vsyncpa %s30, 0
    %32 = vsyncpa [#allocation13], 0
    %s33 = scalar_lea.sflag [#allocation13], 1
    %34 = vsyncpa %s33, 0
    %35 = vsyncpa [#allocation5], 0
    %s36 = scalar_lea.sflag [#allocation5], 1
    %37 = vsyncpa %s36, 0
    loop: start=0, step=1, limit=6
    $region2: #{tpu_custom_call.1} parent=1 // loop_pre_header
      _
    $region3: #{tpu_custom_call.1} parent=1 // loop_header
      %s39 = sphi 0, %s43
      %p40 = scmp.ge.s32.totalorder %s39, 6
      %s46 = sphi 0, %s58
      %s47 = sphi 0, %s54
      %s48 = sphi 0, %s46
      %s49 = sphi 0, %s47
      %s50 = sphi 0, %s48
      %s51 = sphi 0, %s49
      %s61 = sphi 0, %s63
      %s64 = sphi 0, %s61
      %s65 = sphi 0, %s64
      %s81 = sphi 0, %s65
      %s87 = sphi 0, %s89
      %s90 = sphi 0, %s87
      %s91 = sphi 0, %s90
      %s107 = sphi 0, %s91
      %s113 = sphi 0, %s115
      %s116 = sphi 0, %s113
      %s117 = sphi 0, %s116
      %s133 = sphi 0, %s117
      %s139 = sphi 0, %s141
      %s142 = sphi 0, %s139
      %s143 = sphi 0, %s142
      %s159 = sphi 0, %s143
      %s165 = sphi 0, %s167
      %s168 = sphi 0, %s165
      %s169 = sphi 0, %s168
      %s185 = sphi 0, %s169
      %s191 = sphi 0, %s193
      %s194 = sphi 0, %s191
      %s195 = sphi 0, %s194
      %s211 = sphi 0, %s195
      %s217 = sphi 0, %s219
      %s220 = sphi 0, %s217
      %s221 = sphi 0, %s220
      %s237 = sphi 0, %s221
      %s243 = sphi 0, %s245
      %s246 = sphi 0, %s243
      %s247 = sphi 0, %s246
      %s263 = sphi 0, %s247
      %s269 = sphi 0, %s271
      %s272 = sphi 0, %s269
      %s273 = sphi 0, %s272
      %s289 = sphi 0, %s273
      %s295 = sphi 0, %s297
      %s298 = sphi 0, %s295
      %s299 = sphi 0, %s298
      %s315 = sphi 0, %s299
      %s321 = sphi 0, %s323
      %s324 = sphi 0, %s321
      %s325 = sphi 0, %s324
      %s341 = sphi 0, %s325
      %s347 = sphi 0, %s349
      %s350 = sphi 0, %s347
      %s351 = sphi 0, %s350
      %s367 = sphi 0, %s351
      %s373 = sphi 0, %s375
      %s376 = sphi 0, %s373
      %s377 = sphi 0, %s376
      %s393 = sphi 0, %s377
      %s399 = sphi 0, %s401
      %s402 = sphi 0, %s399
      %s403 = sphi 0, %s402
      %s419 = sphi 0, %s403
      %s425 = sphi 0, %s427
      %s428 = sphi 0, %s425
      %s429 = sphi 0, %s428
      %s445 = sphi 0, %s429
      %s451 = sphi 0, %s453
      %s454 = sphi 0, %s451
      %s455 = sphi 0, %s454
      %s471 = sphi 0, %s455
      %s477 = sphi 0, %s479
      %s480 = sphi 0, %s477
      %s481 = sphi 0, %s480
      %s497 = sphi 0, %s481
      %s503 = sphi 0, %s505
      %s506 = sphi 0, %s503
      %s507 = sphi 0, %s506
      %s523 = sphi 0, %s507
      %s529 = sphi 0, %s531
      %s532 = sphi 0, %s529
      %s533 = sphi 0, %s532
      %s549 = sphi 0, %s533
    $region4: #{tpu_custom_call.1} parent=1 // loop_header_branch
      %42 = sbr.rel (%p40) target = $region8
    $region5: #{tpu_custom_call.1} parent=1 // loop_body
      %s44 = ssub.s32 %s39, 1
      %s45 = ssub.s32 %s39, 2
      %s52 = sadd.s32 1, %s47
      %p53 = scmp.ge.s32.totalorder %s52, 2
      %s54 = scalar_select %p53, 0, %s52
      %s55 = sadd.s32 1, %s46
      %s56 = scalar_select %p53, %s55, %s46
      %p57 = scmp.ge.s32.totalorder %s56, 2
      %s58 = scalar_select %p57, 0, %s56
      %s59 = ssub.s32 %s46, %s58
      %p60 = scmp.eq.s32.totalorder %s59, 0
      %s62 = sadd.s32 %s61, 1
      %s63 = scalar_select %p60, %s61, %s62
      %p66 = pneg %p60
      %p67 = scmp.eq.s32.totalorder %s39, 3
      %p68 = por %p66, %p67
      %p69 = scmp.ne.s32.totalorder %s61, %s64
      %p70 = scmp.eq.s32.totalorder %s39, 0
      %p71 = por %p69, %p70
      %p72 = scmp.ne.s32.totalorder %s61, %s64
      %p73 = scmp.eq.s32.totalorder %s44, 3
      %p74 = por %p72, %p73
      %p75 = scmp.ne.s32.totalorder %s64, %s65
      %p76 = scmp.eq.s32.totalorder %s44, 0
      %p77 = por %p75, %p76
      %p78 = scmp.ne.s32.totalorder %s64, %s65
      %p79 = scmp.eq.s32.totalorder %s45, 3
      %p80 = por %p78, %p79
      %p82 = scmp.ne.s32.totalorder %s65, %s81
      %p83 = scmp.eq.s32.totalorder %s45, 0
      %p84 = por %p82, %p83
      %s85 = ssub.s32 %s46, %s58
      %p86 = scmp.eq.s32.totalorder %s85, 0
      %s88 = sadd.s32 %s87, 1
      %s89 = scalar_select %p86, %s87, %s88
      %p92 = pneg %p86
      %p93 = scmp.eq.s32.totalorder %s39, 3
      %p94 = por %p92, %p93
      %p95 = scmp.ne.s32.totalorder %s87, %s90
      %p96 = scmp.eq.s32.totalorder %s39, 0
      %p97 = por %p95, %p96
      %p98 = scmp.ne.s32.totalorder %s87, %s90
      %p99 = scmp.eq.s32.totalorder %s44, 3
      %p100 = por %p98, %p99
      %p101 = scmp.ne.s32.totalorder %s90, %s91
      %p102 = scmp.eq.s32.totalorder %s44, 0
      %p103 = por %p101, %p102
      %p104 = scmp.ne.s32.totalorder %s90, %s91
      %p105 = scmp.eq.s32.totalorder %s45, 3
      %p106 = por %p104, %p105
      %p108 = scmp.ne.s32.totalorder %s91, %s107
      %p109 = scmp.eq.s32.totalorder %s45, 0
      %p110 = por %p108, %p109
      %s111 = ssub.s32 %s47, %s54
      %p112 = scmp.eq.s32.totalorder %s111, 0
      %s114 = sadd.s32 %s113, 1
      %s115 = scalar_select %p112, %s113, %s114
      %p118 = pneg %p112
      %p119 = scmp.eq.s32.totalorder %s39, 3
      %p120 = por %p118, %p119
      %p121 = scmp.ne.s32.totalorder %s113, %s116
      %p122 = scmp.eq.s32.totalorder %s39, 0
      %p123 = por %p121, %p122
      %p124 = scmp.ne.s32.totalorder %s113, %s116
      %p125 = scmp.eq.s32.totalorder %s44, 3
      %p126 = por %p124, %p125
      %p127 = scmp.ne.s32.totalorder %s116, %s117
      %p128 = scmp.eq.s32.totalorder %s44, 0
      %p129 = por %p127, %p128
      %p130 = scmp.ne.s32.totalorder %s116, %s117
      %p131 = scmp.eq.s32.totalorder %s45, 3
      %p132 = por %p130, %p131
      %p134 = scmp.ne.s32.totalorder %s117, %s133
      %p135 = scmp.eq.s32.totalorder %s45, 0
      %p136 = por %p134, %p135
      %s137 = ssub.s32 %s47, %s54
      %p138 = scmp.eq.s32.totalorder %s137, 0
      %s140 = sadd.s32 %s139, 1
      %s141 = scalar_select %p138, %s139, %s140
      %p144 = pneg %p138
      %p145 = scmp.eq.s32.totalorder %s39, 3
      %p146 = por %p144, %p145
      %p147 = scmp.ne.s32.totalorder %s139, %s142
      %p148 = scmp.eq.s32.totalorder %s39, 0
      %p149 = por %p147, %p148
      %p150 = scmp.ne.s32.totalorder %s139, %s142
      %p151 = scmp.eq.s32.totalorder %s44, 3
      %p152 = por %p150, %p151
      %p153 = scmp.ne.s32.totalorder %s142, %s143
      %p154 = scmp.eq.s32.totalorder %s44, 0
      %p155 = por %p153, %p154
      %p156 = scmp.ne.s32.totalorder %s142, %s143
      %p157 = scmp.eq.s32.totalorder %s45, 3
      %p158 = por %p156, %p157
      %p160 = scmp.ne.s32.totalorder %s143, %s159
      %p161 = scmp.eq.s32.totalorder %s45, 0
      %p162 = por %p160, %p161
      %s163 = ssub.s32 %s47, %s54
      %p164 = scmp.eq.s32.totalorder %s163, 0
      %s166 = sadd.s32 %s165, 1
      %s167 = scalar_select %p164, %s165, %s166
      %p170 = pneg %p164
      %p171 = scmp.eq.s32.totalorder %s39, 3
      %p172 = por %p170, %p171
      %p173 = scmp.ne.s32.totalorder %s165, %s168
      %p174 = scmp.eq.s32.totalorder %s39, 0
      %p175 = por %p173, %p174
      %p176 = scmp.ne.s32.totalorder %s165, %s168
      %p177 = scmp.eq.s32.totalorder %s44, 3
      %p178 = por %p176, %p177
      %p179 = scmp.ne.s32.totalorder %s168, %s169
      %p180 = scmp.eq.s32.totalorder %s44, 0
      %p181 = por %p179, %p180
      %p182 = scmp.ne.s32.totalorder %s168, %s169
      %p183 = scmp.eq.s32.totalorder %s45, 3
      %p184 = por %p182, %p183
      %p186 = scmp.ne.s32.totalorder %s169, %s185
      %p187 = scmp.eq.s32.totalorder %s45, 0
      %p188 = por %p186, %p187
      %s189 = ssub.s32 %s47, %s54
      %p190 = scmp.eq.s32.totalorder %s189, 0
      %s192 = sadd.s32 %s191, 1
      %s193 = scalar_select %p190, %s191, %s192
      %p196 = pneg %p190
      %p197 = scmp.eq.s32.totalorder %s39, 3
      %p198 = por %p196, %p197
      %p199 = scmp.ne.s32.totalorder %s191, %s194
      %p200 = scmp.eq.s32.totalorder %s39, 0
      %p201 = por %p199, %p200
      %p202 = scmp.ne.s32.totalorder %s191, %s194
      %p203 = scmp.eq.s32.totalorder %s44, 3
      %p204 = por %p202, %p203
      %p205 = scmp.ne.s32.totalorder %s194, %s195
      %p206 = scmp.eq.s32.totalorder %s44, 0
      %p207 = por %p205, %p206
      %p208 = scmp.ne.s32.totalorder %s194, %s195
      %p209 = scmp.eq.s32.totalorder %s45, 3
      %p210 = por %p208, %p209
      %p212 = scmp.ne.s32.totalorder %s195, %s211
      %p213 = scmp.eq.s32.totalorder %s45, 0
      %p214 = por %p212, %p213
      %s215 = ssub.s32 %s47, %s54
      %p216 = scmp.eq.s32.totalorder %s215, 0
      %s218 = sadd.s32 %s217, 1
      %s219 = scalar_select %p216, %s217, %s218
      %p222 = pneg %p216
      %p223 = scmp.eq.s32.totalorder %s39, 3
      %p224 = por %p222, %p223
      %p225 = scmp.ne.s32.totalorder %s217, %s220
      %p226 = scmp.eq.s32.totalorder %s39, 0
      %p227 = por %p225, %p226
      %p228 = scmp.ne.s32.totalorder %s217, %s220
      %p229 = scmp.eq.s32.totalorder %s44, 3
      %p230 = por %p228, %p229
      %p231 = scmp.ne.s32.totalorder %s220, %s221
      %p232 = scmp.eq.s32.totalorder %s44, 0
      %p233 = por %p231, %p232
      %p234 = scmp.ne.s32.totalorder %s220, %s221
      %p235 = scmp.eq.s32.totalorder %s45, 3
      %p236 = por %p234, %p235
      %p238 = scmp.ne.s32.totalorder %s221, %s237
      %p239 = scmp.eq.s32.totalorder %s45, 0
      %p240 = por %p238, %p239
      %s241 = ssub.s32 %s47, %s54
      %p242 = scmp.eq.s32.totalorder %s241, 0
      %s244 = sadd.s32 %s243, 1
      %s245 = scalar_select %p242, %s243, %s244
      %p248 = pneg %p242
      %p249 = scmp.eq.s32.totalorder %s39, 3
      %p250 = por %p248, %p249
      %p251 = scmp.ne.s32.totalorder %s243, %s246
      %p252 = scmp.eq.s32.totalorder %s39, 0
      %p253 = por %p251, %p252
      %p254 = scmp.ne.s32.totalorder %s243, %s246
      %p255 = scmp.eq.s32.totalorder %s44, 3
      %p256 = por %p254, %p255
      %p257 = scmp.ne.s32.totalorder %s246, %s247
      %p258 = scmp.eq.s32.totalorder %s44, 0
      %p259 = por %p257, %p258
      %p260 = scmp.ne.s32.totalorder %s246, %s247
      %p261 = scmp.eq.s32.totalorder %s45, 3
      %p262 = por %p260, %p261
      %p264 = scmp.ne.s32.totalorder %s247, %s263
      %p265 = scmp.eq.s32.totalorder %s45, 0
      %p266 = por %p264, %p265
      %s267 = ssub.s32 %s47, %s54
      %p268 = scmp.eq.s32.totalorder %s267, 0
      %s270 = sadd.s32 %s269, 1
      %s271 = scalar_select %p268, %s269, %s270
      %p274 = pneg %p268
      %p275 = scmp.eq.s32.totalorder %s39, 3
      %p276 = por %p274, %p275
      %p277 = scmp.ne.s32.totalorder %s269, %s272
      %p278 = scmp.eq.s32.totalorder %s39, 0
      %p279 = por %p277, %p278
      %p280 = scmp.ne.s32.totalorder %s269, %s272
      %p281 = scmp.eq.s32.totalorder %s44, 3
      %p282 = por %p280, %p281
      %p283 = scmp.ne.s32.totalorder %s272, %s273
      %p284 = scmp.eq.s32.totalorder %s44, 0
      %p285 = por %p283, %p284
      %p286 = scmp.ne.s32.totalorder %s272, %s273
      %p287 = scmp.eq.s32.totalorder %s45, 3
      %p288 = por %p286, %p287
      %p290 = scmp.ne.s32.totalorder %s273, %s289
      %p291 = scmp.eq.s32.totalorder %s45, 0
      %p292 = por %p290, %p291
      %s293 = ssub.s32 %s47, %s54
      %p294 = scmp.eq.s32.totalorder %s293, 0
      %s296 = sadd.s32 %s295, 1
      %s297 = scalar_select %p294, %s295, %s296
      %p300 = pneg %p294
      %p301 = scmp.eq.s32.totalorder %s39, 3
      %p302 = por %p300, %p301
      %p303 = scmp.ne.s32.totalorder %s295, %s298
      %p304 = scmp.eq.s32.totalorder %s39, 0
      %p305 = por %p303, %p304
      %p306 = scmp.ne.s32.totalorder %s295, %s298
      %p307 = scmp.eq.s32.totalorder %s44, 3
      %p308 = por %p306, %p307
      %p309 = scmp.ne.s32.totalorder %s298, %s299
      %p310 = scmp.eq.s32.totalorder %s44, 0
      %p311 = por %p309, %p310
      %p312 = scmp.ne.s32.totalorder %s298, %s299
      %p313 = scmp.eq.s32.totalorder %s45, 3
      %p314 = por %p312, %p313
      %p316 = scmp.ne.s32.totalorder %s299, %s315
      %p317 = scmp.eq.s32.totalorder %s45, 0
      %p318 = por %p316, %p317
      %s319 = ssub.s32 %s47, %s54
      %p320 = scmp.eq.s32.totalorder %s319, 0
      %s322 = sadd.s32 %s321, 1
      %s323 = scalar_select %p320, %s321, %s322
      %p326 = pneg %p320
      %p327 = scmp.eq.s32.totalorder %s39, 3
      %p328 = por %p326, %p327
      %p329 = scmp.ne.s32.totalorder %s321, %s324
      %p330 = scmp.eq.s32.totalorder %s39, 0
      %p331 = por %p329, %p330
      %p332 = scmp.ne.s32.totalorder %s321, %s324
      %p333 = scmp.eq.s32.totalorder %s44, 3
      %p334 = por %p332, %p333
      %p335 = scmp.ne.s32.totalorder %s324, %s325
      %p336 = scmp.eq.s32.totalorder %s44, 0
      %p337 = por %p335, %p336
      %p338 = scmp.ne.s32.totalorder %s324, %s325
      %p339 = scmp.eq.s32.totalorder %s45, 3
      %p340 = por %p338, %p339
      %p342 = scmp.ne.s32.totalorder %s325, %s341
      %p343 = scmp.eq.s32.totalorder %s45, 0
      %p344 = por %p342, %p343
      %s345 = ssub.s32 %s47, %s54
      %p346 = scmp.eq.s32.totalorder %s345, 0
      %s348 = sadd.s32 %s347, 1
      %s349 = scalar_select %p346, %s347, %s348
      %p352 = pneg %p346
      %p353 = scmp.eq.s32.totalorder %s39, 3
      %p354 = por %p352, %p353
      %p355 = scmp.ne.s32.totalorder %s347, %s350
      %p356 = scmp.eq.s32.totalorder %s39, 0
      %p357 = por %p355, %p356
      %p358 = scmp.ne.s32.totalorder %s347, %s350
      %p359 = scmp.eq.s32.totalorder %s44, 3
      %p360 = por %p358, %p359
      %p361 = scmp.ne.s32.totalorder %s350, %s351
      %p362 = scmp.eq.s32.totalorder %s44, 0
      %p363 = por %p361, %p362
      %p364 = scmp.ne.s32.totalorder %s350, %s351
      %p365 = scmp.eq.s32.totalorder %s45, 3
      %p366 = por %p364, %p365
      %p368 = scmp.ne.s32.totalorder %s351, %s367
      %p369 = scmp.eq.s32.totalorder %s45, 0
      %p370 = por %p368, %p369
      %s371 = ssub.s32 %s47, %s54
      %p372 = scmp.eq.s32.totalorder %s371, 0
      %s374 = sadd.s32 %s373, 1
      %s375 = scalar_select %p372, %s373, %s374
      %p378 = pneg %p372
      %p379 = scmp.eq.s32.totalorder %s39, 3
      %p380 = por %p378, %p379
      %p381 = scmp.ne.s32.totalorder %s373, %s376
      %p382 = scmp.eq.s32.totalorder %s39, 0
      %p383 = por %p381, %p382
      %p384 = scmp.ne.s32.totalorder %s373, %s376
      %p385 = scmp.eq.s32.totalorder %s44, 3
      %p386 = por %p384, %p385
      %p387 = scmp.ne.s32.totalorder %s376, %s377
      %p388 = scmp.eq.s32.totalorder %s44, 0
      %p389 = por %p387, %p388
      %p390 = scmp.ne.s32.totalorder %s376, %s377
      %p391 = scmp.eq.s32.totalorder %s45, 3
      %p392 = por %p390, %p391
      %p394 = scmp.ne.s32.totalorder %s377, %s393
      %p395 = scmp.eq.s32.totalorder %s45, 0
      %p396 = por %p394, %p395
      %s397 = ssub.s32 %s47, %s54
      %p398 = scmp.eq.s32.totalorder %s397, 0
      %s400 = sadd.s32 %s399, 1
      %s401 = scalar_select %p398, %s399, %s400
      %p404 = pneg %p398
      %p405 = scmp.eq.s32.totalorder %s39, 3
      %p406 = por %p404, %p405
      %p407 = scmp.ne.s32.totalorder %s399, %s402
      %p408 = scmp.eq.s32.totalorder %s39, 0
      %p409 = por %p407, %p408
      %p410 = scmp.ne.s32.totalorder %s399, %s402
      %p411 = scmp.eq.s32.totalorder %s44, 3
      %p412 = por %p410, %p411
      %p413 = scmp.ne.s32.totalorder %s402, %s403
      %p414 = scmp.eq.s32.totalorder %s44, 0
      %p415 = por %p413, %p414
      %p416 = scmp.ne.s32.totalorder %s402, %s403
      %p417 = scmp.eq.s32.totalorder %s45, 3
      %p418 = por %p416, %p417
      %p420 = scmp.ne.s32.totalorder %s403, %s419
      %p421 = scmp.eq.s32.totalorder %s45, 0
      %p422 = por %p420, %p421
      %s423 = ssub.s32 %s47, %s54
      %p424 = scmp.eq.s32.totalorder %s423, 0
      %s426 = sadd.s32 %s425, 1
      %s427 = scalar_select %p424, %s425, %s426
      %p430 = pneg %p424
      %p431 = scmp.eq.s32.totalorder %s39, 3
      %p432 = por %p430, %p431
      %p433 = scmp.ne.s32.totalorder %s425, %s428
      %p434 = scmp.eq.s32.totalorder %s39, 0
      %p435 = por %p433, %p434
      %p436 = scmp.ne.s32.totalorder %s425, %s428
      %p437 = scmp.eq.s32.totalorder %s44, 3
      %p438 = por %p436, %p437
      %p439 = scmp.ne.s32.totalorder %s428, %s429
      %p440 = scmp.eq.s32.totalorder %s44, 0
      %p441 = por %p439, %p440
      %p442 = scmp.ne.s32.totalorder %s428, %s429
      %p443 = scmp.eq.s32.totalorder %s45, 3
      %p444 = por %p442, %p443
      %p446 = scmp.ne.s32.totalorder %s429, %s445
      %p447 = scmp.eq.s32.totalorder %s45, 0
      %p448 = por %p446, %p447
      %s449 = ssub.s32 %s47, %s54
      %p450 = scmp.eq.s32.totalorder %s449, 0
      %s452 = sadd.s32 %s451, 1
      %s453 = scalar_select %p450, %s451, %s452
      %p456 = pneg %p450
      %p457 = scmp.eq.s32.totalorder %s39, 3
      %p458 = por %p456, %p457
      %p459 = scmp.ne.s32.totalorder %s451, %s454
      %p460 = scmp.eq.s32.totalorder %s39, 0
      %p461 = por %p459, %p460
      %p462 = scmp.ne.s32.totalorder %s451, %s454
      %p463 = scmp.eq.s32.totalorder %s44, 3
      %p464 = por %p462, %p463
      %p465 = scmp.ne.s32.totalorder %s454, %s455
      %p466 = scmp.eq.s32.totalorder %s44, 0
      %p467 = por %p465, %p466
      %p468 = scmp.ne.s32.totalorder %s454, %s455
      %p469 = scmp.eq.s32.totalorder %s45, 3
      %p470 = por %p468, %p469
      %p472 = scmp.ne.s32.totalorder %s455, %s471
      %p473 = scmp.eq.s32.totalorder %s45, 0
      %p474 = por %p472, %p473
      %s475 = ssub.s32 %s47, %s54
      %p476 = scmp.eq.s32.totalorder %s475, 0
      %s478 = sadd.s32 %s477, 1
      %s479 = scalar_select %p476, %s477, %s478
      %p482 = pneg %p476
      %p483 = scmp.eq.s32.totalorder %s39, 3
      %p484 = por %p482, %p483
      %p485 = scmp.ne.s32.totalorder %s477, %s480
      %p486 = scmp.eq.s32.totalorder %s39, 0
      %p487 = por %p485, %p486
      %p488 = scmp.ne.s32.totalorder %s477, %s480
      %p489 = scmp.eq.s32.totalorder %s44, 3
      %p490 = por %p488, %p489
      %p491 = scmp.ne.s32.totalorder %s480, %s481
      %p492 = scmp.eq.s32.totalorder %s44, 0
      %p493 = por %p491, %p492
      %p494 = scmp.ne.s32.totalorder %s480, %s481
      %p495 = scmp.eq.s32.totalorder %s45, 3
      %p496 = por %p494, %p495
      %p498 = scmp.ne.s32.totalorder %s481, %s497
      %p499 = scmp.eq.s32.totalorder %s45, 0
      %p500 = por %p498, %p499
      %s501 = ssub.s32 %s47, %s54
      %p502 = scmp.eq.s32.totalorder %s501, 0
      %s504 = sadd.s32 %s503, 1
      %s505 = scalar_select %p502, %s503, %s504
      %p508 = pneg %p502
      %p509 = scmp.eq.s32.totalorder %s39, 3
      %p510 = por %p508, %p509
      %p511 = scmp.ne.s32.totalorder %s503, %s506
      %p512 = scmp.eq.s32.totalorder %s39, 0
      %p513 = por %p511, %p512
      %p514 = scmp.ne.s32.totalorder %s503, %s506
      %p515 = scmp.eq.s32.totalorder %s44, 3
      %p516 = por %p514, %p515
      %p517 = scmp.ne.s32.totalorder %s506, %s507
      %p518 = scmp.eq.s32.totalorder %s44, 0
      %p519 = por %p517, %p518
      %p520 = scmp.ne.s32.totalorder %s506, %s507
      %p521 = scmp.eq.s32.totalorder %s45, 3
      %p522 = por %p520, %p521
      %p524 = scmp.ne.s32.totalorder %s507, %s523
      %p525 = scmp.eq.s32.totalorder %s45, 0
      %p526 = por %p524, %p525
      %s527 = ssub.s32 %s46, %s58
      %p528 = scmp.eq.s32.totalorder %s527, 0
      %s530 = sadd.s32 %s529, 1
      %s531 = scalar_select %p528, %s529, %s530
      %p534 = pneg %p528
      %p535 = scmp.eq.s32.totalorder %s39, 3
      %p536 = por %p534, %p535
      %p537 = scmp.ne.s32.totalorder %s529, %s532
      %p538 = scmp.eq.s32.totalorder %s39, 0
      %p539 = por %p537, %p538
      %p540 = scmp.ne.s32.totalorder %s529, %s532
      %p541 = scmp.eq.s32.totalorder %s44, 3
      %p542 = por %p540, %p541
      %p543 = scmp.ne.s32.totalorder %s532, %s533
      %p544 = scmp.eq.s32.totalorder %s44, 0
      %p545 = por %p543, %p544
      %p546 = scmp.ne.s32.totalorder %s532, %s533
      %p547 = scmp.eq.s32.totalorder %s45, 3
      %p548 = por %p546, %p547
      %p550 = scmp.ne.s32.totalorder %s533, %s549
      %p551 = scmp.eq.s32.totalorder %s45, 0
      %p552 = por %p550, %p551
      %p553 = scmp.le.s32.totalorder 1, %s39
      %p554 = scmp.lt.s32.totalorder %s39, 5
      %p555 = pnand %p553, %p554
      %p556 = pneg %p555
      // Predicated region
      $region9: #{tpu_custom_call.1} parent=5 // pred_check
        _
      $region10: #{tpu_custom_call.1} parent=5 // pred_check_branch
        %558 = sbr.rel (%p555) target = $region12
      $region11: #{tpu_custom_call.1} parent=5 // pred_region
        %s559 = ssub.s32 %s39, 1
      $region12: #{tpu_custom_call.1} parent=5 // pred_fallthru
        _
      %p560 = scmp.lt.s32.totalorder %s39, 4
      // Predicated region
      $region13: #{tpu_custom_call.1} parent=5 // pred_check
        %p561 = pneg %p560
      $region14: #{tpu_custom_call.1} parent=5 // pred_check_branch
        %563 = sbr.rel (%p561) target = $region16
      $region15: #{tpu_custom_call.1} parent=5 // pred_region
        // Predicated region
        $region17: #{tpu_custom_call.1} parent=15 // pred_check
          %p564 = pneg %p71
        $region18: #{tpu_custom_call.1} parent=15 // pred_check_branch
          %566 = sbr.rel (%p564) target = $region20
        $region19: #{tpu_custom_call.1} parent=15 // pred_region
          %s567 = sand.u32 %s61, 1
          %s568 = scalar_lea.sflag [#allocation4], %s567
          %s569 = sand.u32 %s61, 1
          %s570 = smul.addr %s569, 8
          %s571 = scalar_lea.vmem [#allocation3], %s570
          %573 = vsyncadd %s568, 0
          %s574 = smul.addr %s46, 8
          %s575 = scalar_lea.hbm %s0, %s574
          %s577 = sshll.u32 %s575, 4
          %s578 = int_to_ptr.hbm [resolvable:$true] %s577
          %s579 = sshll.u32 %s571, 4
          %s580 = int_to_ptr.vmem [resolvable:$true] %s579
          %582 = dma.hbm_to_vmem [thread:$0]  %s578, 128, %s580, %s568
        $region20: #{tpu_custom_call.1} parent=15 // pred_fallthru
          _
        // Predicated region
        $region21: #{tpu_custom_call.1} parent=15 // pred_check
          %p583 = pneg %p97
        $region22: #{tpu_custom_call.1} parent=15 // pred_check_branch
          %585 = sbr.rel (%p583) target = $region24
        $region23: #{tpu_custom_call.1} parent=15 // pred_region
          %s586 = sand.u32 %s39, 1
          %s587 = scalar_lea.sflag [#allocation7], %s586
          %s588 = sand.u32 %s87, 1
          %s589 = scalar_lea.vmem [#allocation6], %s588
          %591 = vsyncadd %s587, 0
          %s592 = scalar_lea.hbm %s1, %s46
          %s594 = sshll.u32 %s592, 4
          %s595 = int_to_ptr.hbm [resolvable:$true] %s594
          %s596 = sshll.u32 %s589, 4
          %s597 = int_to_ptr.vmem [resolvable:$true] %s596
          %599 = dma.hbm_to_vmem [thread:$0]  %s595, 16, %s597, %s587
        $region24: #{tpu_custom_call.1} parent=15 // pred_fallthru
          _
        // Predicated region
        $region25: #{tpu_custom_call.1} parent=15 // pred_check
          %p600 = pneg %p123
        $region26: #{tpu_custom_call.1} parent=15 // pred_check_branch
          %602 = sbr.rel (%p600) target = $region28
        $region27: #{tpu_custom_call.1} parent=15 // pred_region
          %p603 = scmp.lt.s32.totalorder %s47, 1
          %s604 = scalar_select %p603, %s47, 1
          %s605 = smul.addr %s604, 4
          %s606 = smul.addr %s605, 4
          %s607 = scalar_lea.vmem %s2, %s606
        $region28: #{tpu_custom_call.1} parent=15 // pred_fallthru
          _
        // Predicated region
        $region29: #{tpu_custom_call.1} parent=15 // pred_check
          %p608 = pneg %p149
        $region30: #{tpu_custom_call.1} parent=15 // pred_check_branch
          %610 = sbr.rel (%p608) target = $region32
        $region31: #{tpu_custom_call.1} parent=15 // pred_region
          %s611 = sand.u32 %s39, 1
          %s612 = scalar_lea.sflag [#allocation7], %s611
          %s613 = sand.u32 %s139, 1
          %s614 = scalar_lea.vmem [#allocation8], %s613
          %616 = vsyncadd %s612, 0
          %s617 = scalar_lea.hbm %s3, %s47
          %s619 = sshll.u32 %s617, 4
          %s620 = int_to_ptr.hbm [resolvable:$true] %s619
          %s621 = sshll.u32 %s614, 4
          %s622 = int_to_ptr.vmem [resolvable:$true] %s621
          %624 = dma.hbm_to_vmem [thread:$0]  %s620, 16, %s622, %s612
        $region32: #{tpu_custom_call.1} parent=15 // pred_fallthru
          _
        // Predicated region
        $region33: #{tpu_custom_call.1} parent=15 // pred_check
          %p625 = pneg %p175
        $region34: #{tpu_custom_call.1} parent=15 // pred_check_branch
          %627 = sbr.rel (%p625) target = $region36
        $region35: #{tpu_custom_call.1} parent=15 // pred_region
          %p628 = scmp.lt.s32.totalorder %s47, 1
          %s629 = scalar_select %p628, %s47, 1
          %s630 = smul.addr %s629, 4
          %s631 = smul.addr %s630, 4
          %s632 = scalar_lea.vmem %s4, %s631
        $region36: #{tpu_custom_call.1} parent=15 // pred_fallthru
          _
        // Predicated region
        $region37: #{tpu_custom_call.1} parent=15 // pred_check
          %p633 = pneg %p201
        $region38: #{tpu_custom_call.1} parent=15 // pred_check_branch
          %635 = sbr.rel (%p633) target = $region40
        $region39: #{tpu_custom_call.1} parent=15 // pred_region
          %p636 = scmp.lt.s32.totalorder %s47, 1
          %s637 = scalar_select %p636, %s47, 1
          %s638 = scalar_lea.vmem %s5, %s637
        $region40: #{tpu_custom_call.1} parent=15 // pred_fallthru
          _
        // Predicated region
        $region41: #{tpu_custom_call.1} parent=15 // pred_check
          %p639 = pneg %p227
        $region42: #{tpu_custom_call.1} parent=15 // pred_check_branch
          %641 = sbr.rel (%p639) target = $region44
        $region43: #{tpu_custom_call.1} parent=15 // pred_region
          %p642 = scmp.lt.s32.totalorder %s47, 1
          %s643 = scalar_select %p642, %s47, 1
          %s644 = smul.addr %s643, 4
          %s645 = smul.addr %s644, 4
          %s646 = scalar_lea.vmem %s6, %s645
        $region44: #{tpu_custom_call.1} parent=15 // pred_fallthru
          _
        // Predicated region
        $region45: #{tpu_custom_call.1} parent=15 // pred_check
          %p647 = pneg %p253
        $region46: #{tpu_custom_call.1} parent=15 // pred_check_branch
          %649 = sbr.rel (%p647) target = $region48
        $region47: #{tpu_custom_call.1} parent=15 // pred_region
          %p650 = scmp.lt.s32.totalorder %s47, 1
          %s651 = scalar_select %p650, %s47, 1
          %s652 = scalar_lea.vmem %s7, %s651
        $region48: #{tpu_custom_call.1} parent=15 // pred_fallthru
          _
        // Predicated region
        $region49: #{tpu_custom_call.1} parent=15 // pred_check
          %p653 = pneg %p279
        $region50: #{tpu_custom_call.1} parent=15 // pred_check_branch
          %655 = sbr.rel (%p653) target = $region52
        $region51: #{tpu_custom_call.1} parent=15 // pred_region
          %s656 = sand.u32 %s39, 1
          %s657 = scalar_lea.sflag [#allocation10], %s656
          %s658 = sand.u32 %s269, 1
          %s659 = smul.addr %s658, 16
          %s660 = scalar_lea.vmem [#allocation9], %s659
          %662 = vsyncadd %s657, 0
          %s663 = smul.addr %s47, 4
          %s664 = smul.addr %s663, 4
          %s665 = scalar_lea.hbm %s8, %s664
          %s666 = sshll.u32 %s665, 4
          %s667 = int_to_ptr.hbm [resolvable:$true] %s666
          %s668 = sshll.u32 %s660, 4
          %s669 = int_to_ptr.vmem [resolvable:$true] %s668
          %674 = dma.hbm_to_vmem [thread:$0]  %s667, 256, %s669, %s657, 64, 64, 4
        $region52: #{tpu_custom_call.1} parent=15 // pred_fallthru
          _
        // Predicated region
        $region53: #{tpu_custom_call.1} parent=15 // pred_check
          %p675 = pneg %p305
        $region54: #{tpu_custom_call.1} parent=15 // pred_check_branch
          %677 = sbr.rel (%p675) target = $region56
        $region55: #{tpu_custom_call.1} parent=15 // pred_region
          %p678 = scmp.lt.s32.totalorder %s47, 1
          %s679 = scalar_select %p678, %s47, 1
          %s680 = scalar_lea.vmem %s9, %s679
        $region56: #{tpu_custom_call.1} parent=15 // pred_fallthru
          _
        // Predicated region
        $region57: #{tpu_custom_call.1} parent=15 // pred_check
          %p681 = pneg %p331
        $region58: #{tpu_custom_call.1} parent=15 // pred_check_branch
          %683 = sbr.rel (%p681) target = $region60
        $region59: #{tpu_custom_call.1} parent=15 // pred_region
          %p684 = scmp.lt.s32.totalorder %s47, 1
          %s685 = scalar_select %p684, %s47, 1
          %s686 = scalar_lea.vmem %s10, %s685
        $region60: #{tpu_custom_call.1} parent=15 // pred_fallthru
          _
        // Predicated region
        $region61: #{tpu_custom_call.1} parent=15 // pred_check
          %p687 = pneg %p357
        $region62: #{tpu_custom_call.1} parent=15 // pred_check_branch
          %689 = sbr.rel (%p687) target = $region64
        $region63: #{tpu_custom_call.1} parent=15 // pred_region
          %s690 = sand.u32 %s39, 1
          %s691 = scalar_lea.sflag [#allocation10], %s690
          %s692 = sand.u32 %s347, 1
          %s693 = scalar_lea.vmem [#allocation11], %s692
          %695 = vsyncadd %s691, 0
          %s696 = scalar_lea.hbm %s11, %s47
          %s698 = sshll.u32 %s696, 4
          %s699 = int_to_ptr.hbm [resolvable:$true] %s698
          %s700 = sshll.u32 %s693, 4
          %s701 = int_to_ptr.vmem [resolvable:$true] %s700
          %703 = dma.hbm_to_vmem [thread:$0]  %s699, 16, %s701, %s691
        $region64: #{tpu_custom_call.1} parent=15 // pred_fallthru
          _
        // Predicated region
        $region65: #{tpu_custom_call.1} parent=15 // pred_check
          %p704 = pneg %p383
        $region66: #{tpu_custom_call.1} parent=15 // pred_check_branch
          %706 = sbr.rel (%p704) target = $region68
        $region67: #{tpu_custom_call.1} parent=15 // pred_region
          %s707 = sand.u32 %s39, 1
          %s708 = scalar_lea.sflag [#allocation13], %s707
          %s709 = sand.u32 %s373, 1
          %s710 = smul.addr %s709, 16
          %s711 = scalar_lea.vmem [#allocation12], %s710
          %713 = vsyncadd %s708, 0
          %s714 = smul.addr %s47, 4
          %s715 = smul.addr %s714, 4
          %s716 = scalar_lea.hbm %s12, %s715
          %s717 = sshll.u32 %s716, 4
          %s718 = int_to_ptr.hbm [resolvable:$true] %s717
          %s719 = sshll.u32 %s711, 4
          %s720 = int_to_ptr.vmem [resolvable:$true] %s719
          %725 = dma.hbm_to_vmem [thread:$0]  %s718, 256, %s720, %s708, 64, 64, 4
        $region68: #{tpu_custom_call.1} parent=15 // pred_fallthru
          _
        // Predicated region
        $region69: #{tpu_custom_call.1} parent=15 // pred_check
          %p726 = pneg %p409
        $region70: #{tpu_custom_call.1} parent=15 // pred_check_branch
          %728 = sbr.rel (%p726) target = $region72
        $region71: #{tpu_custom_call.1} parent=15 // pred_region
          %p729 = scmp.lt.s32.totalorder %s47, 1
          %s730 = scalar_select %p729, %s47, 1
          %s731 = scalar_lea.vmem %s13, %s730
        $region72: #{tpu_custom_call.1} parent=15 // pred_fallthru
          _
        // Predicated region
        $region73: #{tpu_custom_call.1} parent=15 // pred_check
          %p732 = pneg %p435
        $region74: #{tpu_custom_call.1} parent=15 // pred_check_branch
          %734 = sbr.rel (%p732) target = $region76
        $region75: #{tpu_custom_call.1} parent=15 // pred_region
          %p735 = scmp.lt.s32.totalorder %s47, 1
          %s736 = scalar_select %p735, %s47, 1
          %s737 = smul.addr %s736, 8
          %s738 = smul.addr %s737, 4
          %s739 = scalar_lea.vmem %s14, %s738
        $region76: #{tpu_custom_call.1} parent=15 // pred_fallthru
          _
        // Predicated region
        $region77: #{tpu_custom_call.1} parent=15 // pred_check
          %p740 = pneg %p461
        $region78: #{tpu_custom_call.1} parent=15 // pred_check_branch
          %742 = sbr.rel (%p740) target = $region80
        $region79: #{tpu_custom_call.1} parent=15 // pred_region
          %p743 = scmp.lt.s32.totalorder %s47, 1
          %s744 = scalar_select %p743, %s47, 1
          %s745 = scalar_lea.vmem %s15, %s744
        $region80: #{tpu_custom_call.1} parent=15 // pred_fallthru
          _
        // Predicated region
        $region81: #{tpu_custom_call.1} parent=15 // pred_check
          %p746 = pneg %p487
        $region82: #{tpu_custom_call.1} parent=15 // pred_check_branch
          %748 = sbr.rel (%p746) target = $region84
        $region83: #{tpu_custom_call.1} parent=15 // pred_region
          %p749 = scmp.lt.s32.totalorder %s47, 1
          %s750 = scalar_select %p749, %s47, 1
          %s751 = scalar_lea.vmem %s16, %s750
        $region84: #{tpu_custom_call.1} parent=15 // pred_fallthru
          _
        // Predicated region
        $region85: #{tpu_custom_call.1} parent=15 // pred_check
          %p752 = pneg %p513
        $region86: #{tpu_custom_call.1} parent=15 // pred_check_branch
          %754 = sbr.rel (%p752) target = $region88
        $region87: #{tpu_custom_call.1} parent=15 // pred_region
          %s755 = sand.u32 %s39, 1
          %s756 = scalar_lea.sflag [#allocation13], %s755
          %s757 = sand.u32 %s503, 1
          %s758 = scalar_lea.vmem [#allocation14], %s757
          %760 = vsyncadd %s756, 0
          %s761 = scalar_lea.hbm %s17, %s47
          %s763 = sshll.u32 %s761, 4
          %s764 = int_to_ptr.hbm [resolvable:$true] %s763
          %s765 = sshll.u32 %s758, 4
          %s766 = int_to_ptr.vmem [resolvable:$true] %s765
          %768 = dma.hbm_to_vmem [thread:$0]  %s764, 16, %s766, %s756
        $region88: #{tpu_custom_call.1} parent=15 // pred_fallthru
          _
      $region16: #{tpu_custom_call.1} parent=5 // pred_fallthru
        _
      %p769 = scmp.le.s32.totalorder 1, %s39
      %p770 = scmp.lt.s32.totalorder %s39, 5
      %p771 = pnand %p769, %p770
      %p772 = pneg %p771
      // Predicated region
      $region89: #{tpu_custom_call.1} parent=5 // pred_check
        _
      $region90: #{tpu_custom_call.1} parent=5 // pred_check_branch
        %774 = sbr.rel (%p771) target = $region92
      $region91: #{tpu_custom_call.1} parent=5 // pred_region
        %s775 = ssub.s32 %s39, 1
        %s776 = sand.u32 %s64, 1
        %s777 = scalar_lea.sflag [#allocation4], %s776
        %s778 = sand.u32 %s64, 1
        %s779 = smul.addr %s778, 8
        %s780 = scalar_lea.vmem [#allocation3], %s779
        // Predicated region
        $region93: #{tpu_custom_call.1} parent=91 // pred_check
          %p781 = pneg %p77
        $region94: #{tpu_custom_call.1} parent=91 // pred_check_branch
          %783 = sbr.rel (%p781) target = $region96
        $region95: #{tpu_custom_call.1} parent=91 // pred_region
          %785 = dma.done %s777, 128
        $region96: #{tpu_custom_call.1} parent=91 // pred_fallthru
          _
        %s786 = sand.u32 %s44, 1
        %s787 = scalar_lea.sflag [#allocation7], %s786
        %s788 = sand.u32 %s90, 1
        %s789 = scalar_lea.vmem [#allocation6], %s788
        // Predicated region
        $region97: #{tpu_custom_call.1} parent=91 // pred_check
          %p790 = pneg %p103
        $region98: #{tpu_custom_call.1} parent=91 // pred_check_branch
          %792 = sbr.rel (%p790) target = $region100
        $region99: #{tpu_custom_call.1} parent=91 // pred_region
          %794 = dma.done %s787, 16
        $region100: #{tpu_custom_call.1} parent=91 // pred_fallthru
          _
        %s795 = sand.u32 %s44, 1
        %s796 = scalar_lea.sflag [#allocation7], %s795
        %s797 = sand.u32 %s142, 1
        %s798 = scalar_lea.vmem [#allocation8], %s797
        // Predicated region
        $region101: #{tpu_custom_call.1} parent=91 // pred_check
          %p799 = pneg %p155
        $region102: #{tpu_custom_call.1} parent=91 // pred_check_branch
          %801 = sbr.rel (%p799) target = $region104
        $region103: #{tpu_custom_call.1} parent=91 // pred_region
          %803 = dma.done %s796, 16
        $region104: #{tpu_custom_call.1} parent=91 // pred_fallthru
          _
        %s804 = sand.u32 %s44, 1
        %s805 = scalar_lea.sflag [#allocation10], %s804
        %s806 = sand.u32 %s272, 1
        %s807 = smul.addr %s806, 16
        %s808 = scalar_lea.vmem [#allocation9], %s807
        // Predicated region
        $region105: #{tpu_custom_call.1} parent=91 // pred_check
          %p809 = pneg %p285
        $region106: #{tpu_custom_call.1} parent=91 // pred_check_branch
          %811 = sbr.rel (%p809) target = $region108
        $region107: #{tpu_custom_call.1} parent=91 // pred_region
          %813 = dma.done %s805, 256
        $region108: #{tpu_custom_call.1} parent=91 // pred_fallthru
          _
        %s814 = sand.u32 %s44, 1
        %s815 = scalar_lea.sflag [#allocation10], %s814
        %s816 = sand.u32 %s350, 1
        %s817 = scalar_lea.vmem [#allocation11], %s816
        // Predicated region
        $region109: #{tpu_custom_call.1} parent=91 // pred_check
          %p818 = pneg %p363
        $region110: #{tpu_custom_call.1} parent=91 // pred_check_branch
          %820 = sbr.rel (%p818) target = $region112
        $region111: #{tpu_custom_call.1} parent=91 // pred_region
          %822 = dma.done %s815, 16
        $region112: #{tpu_custom_call.1} parent=91 // pred_fallthru
          _
        %s823 = sand.u32 %s44, 1
        %s824 = scalar_lea.sflag [#allocation13], %s823
        %s825 = sand.u32 %s376, 1
        %s826 = smul.addr %s825, 16
        %s827 = scalar_lea.vmem [#allocation12], %s826
        // Predicated region
        $region113: #{tpu_custom_call.1} parent=91 // pred_check
          %p828 = pneg %p389
        $region114: #{tpu_custom_call.1} parent=91 // pred_check_branch
          %830 = sbr.rel (%p828) target = $region116
        $region115: #{tpu_custom_call.1} parent=91 // pred_region
          %832 = dma.done %s824, 256
        $region116: #{tpu_custom_call.1} parent=91 // pred_fallthru
          _
        %s833 = sand.u32 %s44, 1
        %s834 = scalar_lea.sflag [#allocation13], %s833
        %s835 = sand.u32 %s506, 1
        %s836 = scalar_lea.vmem [#allocation14], %s835
        // Predicated region
        $region117: #{tpu_custom_call.1} parent=91 // pred_check
          %p837 = pneg %p519
        $region118: #{tpu_custom_call.1} parent=91 // pred_check_branch
          %839 = sbr.rel (%p837) target = $region120
        $region119: #{tpu_custom_call.1} parent=91 // pred_region
          %841 = dma.done %s834, 16
        $region120: #{tpu_custom_call.1} parent=91 // pred_fallthru
          _
        %s842 = sand.u32 %s64, 1
        %s843 = scalar_lea.sflag [#allocation4], %s842
        %s844 = sand.u32 %s64, 1
        %s845 = smul.addr %s844, 8
        %s846 = scalar_lea.vmem [#allocation3], %s845
        %p847 = pneg %p77
        %p848 = pneg %p74
        %s849 = sand.u32 %s44, 1
        %s850 = scalar_lea.sflag [#allocation7], %s849
        %s851 = sand.u32 %s90, 1
        %s852 = scalar_lea.vmem [#allocation6], %s851
        %p853 = pneg %p103
        %p854 = pneg %p100
        %p855 = scmp.lt.s32.totalorder %s49, 1
        %s856 = scalar_select %p855, %s49, 1
        %s857 = smul.addr %s856, 4
        %s858 = smul.addr %s857, 4
        %s859 = scalar_lea.vmem %s2, %s858
        %p860 = pneg %p129
        %p861 = pneg %p126
        %s862 = sand.u32 %s44, 1
        %s863 = scalar_lea.sflag [#allocation7], %s862
        %s864 = sand.u32 %s142, 1
        %s865 = scalar_lea.vmem [#allocation8], %s864
        %p866 = pneg %p155
        %p867 = pneg %p152
        %p868 = scmp.lt.s32.totalorder %s49, 1
        %s869 = scalar_select %p868, %s49, 1
        %s870 = smul.addr %s869, 4
        %s871 = smul.addr %s870, 4
        %s872 = scalar_lea.vmem %s4, %s871
        %p873 = pneg %p181
        %p874 = pneg %p178
        %p875 = scmp.lt.s32.totalorder %s49, 1
        %s876 = scalar_select %p875, %s49, 1
        %s877 = scalar_lea.vmem %s5, %s876
        %p878 = pneg %p207
        %p879 = pneg %p204
        %p880 = scmp.lt.s32.totalorder %s49, 1
        %s881 = scalar_select %p880, %s49, 1
        %s882 = smul.addr %s881, 4
        %s883 = smul.addr %s882, 4
        %s884 = scalar_lea.vmem %s6, %s883
        %p885 = pneg %p233
        %p886 = pneg %p230
        %p887 = scmp.lt.s32.totalorder %s49, 1
        %s888 = scalar_select %p887, %s49, 1
        %s889 = scalar_lea.vmem %s7, %s888
        %p890 = pneg %p259
        %p891 = pneg %p256
        %s892 = sand.u32 %s44, 1
        %s893 = scalar_lea.sflag [#allocation10], %s892
        %s894 = sand.u32 %s272, 1
        %s895 = smul.addr %s894, 16
        %s896 = scalar_lea.vmem [#allocation9], %s895
        %p897 = pneg %p285
        %p898 = pneg %p282
        %p899 = scmp.lt.s32.totalorder %s49, 1
        %s900 = scalar_select %p899, %s49, 1
        %s901 = scalar_lea.vmem %s9, %s900
        %p902 = pneg %p311
        %p903 = pneg %p308
        %p904 = scmp.lt.s32.totalorder %s49, 1
        %s905 = scalar_select %p904, %s49, 1
        %s906 = scalar_lea.vmem %s10, %s905
        %p907 = pneg %p337
        %p908 = pneg %p334
        %s909 = sand.u32 %s44, 1
        %s910 = scalar_lea.sflag [#allocation10], %s909
        %s911 = sand.u32 %s350, 1
        %s912 = scalar_lea.vmem [#allocation11], %s911
        %p913 = pneg %p363
        %p914 = pneg %p360
        %s915 = sand.u32 %s44, 1
        %s916 = scalar_lea.sflag [#allocation13], %s915
        %s917 = sand.u32 %s376, 1
        %s918 = smul.addr %s917, 16
        %s919 = scalar_lea.vmem [#allocation12], %s918
        %p920 = pneg %p389
        %p921 = pneg %p386
        %p922 = scmp.lt.s32.totalorder %s49, 1
        %s923 = scalar_select %p922, %s49, 1
        %s924 = scalar_lea.vmem %s13, %s923
        %p925 = pneg %p415
        %p926 = pneg %p412
        %p927 = scmp.lt.s32.totalorder %s49, 1
        %s928 = scalar_select %p927, %s49, 1
        %s929 = smul.addr %s928, 8
        %s930 = smul.addr %s929, 4
        %s931 = scalar_lea.vmem %s14, %s930
        %p932 = pneg %p441
        %p933 = pneg %p438
        %p934 = scmp.lt.s32.totalorder %s49, 1
        %s935 = scalar_select %p934, %s49, 1
        %s936 = scalar_lea.vmem %s15, %s935
        %p937 = pneg %p467
        %p938 = pneg %p464
        %p939 = scmp.lt.s32.totalorder %s49, 1
        %s940 = scalar_select %p939, %s49, 1
        %s941 = scalar_lea.vmem %s16, %s940
        %p942 = pneg %p493
        %p943 = pneg %p490
        %s944 = sand.u32 %s44, 1
        %s945 = scalar_lea.sflag [#allocation13], %s944
        %s946 = sand.u32 %s506, 1
        %s947 = scalar_lea.vmem [#allocation14], %s946
        %p948 = pneg %p519
        %p949 = pneg %p516
        %p950 = pneg %p545
        %p951 = pneg %p542
        %s952 = sand.u32 %s532, 1
        %s953 = scalar_lea.sflag [#allocation5], %s952
        %s954 = sand.u32 %s532, 1
        %s955 = smul.addr %s954, 8
        %s956 = scalar_lea.vmem [#allocation15], %s955
        %p957 = scmp.lt.s32.totalorder %s49, 1
        %s958 = scalar_select %p957, %s49, 1
        %s959 = smul.addr %s958, 4
        %s960 = smul.addr %s959, 4
        %s961 = scalar_lea.vmem %s2, %s960
        %p962 = scmp.lt.s32.totalorder %s49, 1
        %s963 = scalar_select %p962, %s49, 1
        %s964 = smul.addr %s963, 4
        %s965 = smul.addr %s964, 4
        %s966 = scalar_lea.vmem %s4, %s965
        %p967 = scmp.lt.s32.totalorder %s49, 1
        %s968 = scalar_select %p967, %s49, 1
        %s969 = scalar_lea.vmem %s5, %s968
        %p970 = scmp.lt.s32.totalorder %s49, 1
        %s971 = scalar_select %p970, %s49, 1
        %s972 = smul.addr %s971, 4
        %s973 = smul.addr %s972, 4
        %s974 = scalar_lea.vmem %s6, %s973
        %p975 = scmp.lt.s32.totalorder %s49, 1
        %s976 = scalar_select %p975, %s49, 1
        %s977 = scalar_lea.vmem %s7, %s976
        %p978 = scmp.lt.s32.totalorder %s49, 1
        %s979 = scalar_select %p978, %s49, 1
        %s980 = scalar_lea.vmem %s9, %s979
        %p981 = scmp.lt.s32.totalorder %s49, 1
        %s982 = scalar_select %p981, %s49, 1
        %s983 = scalar_lea.vmem %s10, %s982
        %p984 = scmp.lt.s32.totalorder %s49, 1
        %s985 = scalar_select %p984, %s49, 1
        %s986 = scalar_lea.vmem %s13, %s985
        %p987 = scmp.lt.s32.totalorder %s49, 1
        %s988 = scalar_select %p987, %s49, 1
        %s989 = smul.addr %s988, 8
        %s990 = smul.addr %s989, 4
        %s991 = scalar_lea.vmem %s14, %s990
        %p992 = scmp.lt.s32.totalorder %s49, 1
        %s993 = scalar_select %p992, %s49, 1
        %s994 = scalar_lea.vmem %s15, %s993
        %p995 = scmp.lt.s32.totalorder %s49, 1
        %s996 = scalar_select %p995, %s49, 1
        %s997 = scalar_lea.vmem %s16, %s996
        %p999 = scmp.eq.s32.totalorder %s49, 0
        // Predicated region
        $region121: #{tpu_custom_call.1} parent=91 // pred_check
          %p1000 = pneg %p999
        $region122: #{tpu_custom_call.1} parent=91 // pred_check_branch
          %1002 = sbr.rel (%p1000) target = $region124
        $region123: #{tpu_custom_call.1} parent=91 // pred_region
          %v1003 = vld [vmem:[%s780] sm:$0xff]
          %vm1004 = vcmask 261120
          %1005 = vst.msk [vmem:[%s956] sm:$0xff] %vm1004, %v1003
        $region124: #{tpu_custom_call.1} parent=91 // pred_fallthru
          _
        %v1006 = vld [vmem:[%s956] sm:$0xff]
        %v1007 = vpack.c.bf16 %v1006, %v1006
        %v1008 = vld [vmem:[%s789] sm:$0x1]
        %v1009 = vmul.f32 %v1008, -1e+09
        %v1010 = vld [vmem:[%s961] sm:$0xf]
        %v1011 = vld [vmem:[%s961 + $0x4] sm:$0xf]
        %v1012 = vld [vmem:[%s961 + $0x8] sm:$0xf]
        %v1013 = vld [vmem:[%s961 + $0xc] sm:$0xf]
        %v1014 = vld [vmem:[%s798] sm:$0x1]
        %v1016 = vperm.slane %v1014, 0
        %v1022 = vunpack.c.l.b16 %v1010
        %v1023 = vunpack.c.l.b16 %v1011
        %v1024 = vunpack.c.l.b16 %v1012
        %v1025 = vunpack.c.l.b16 %v1013
        %v1026 = vpack.c.b16 %v1023, %v1022
        %v1027 = vpack.c.b16 %v1025, %v1024
        %vm1030 = vcmask 261120
        %v1032 = vsel %vm1030, %v1007, 0
        %1034 = vmatpush.bf16.msra.mxu0 0
        %1035 = vmatpush.bf16.msra.mxu0 0
        %1036 = vmatpush.bf16.msra.mxu0 0
        %1037 = vmatpush.bf16.msra.mxu0 0
        %1038 = vmatpush.bf16.msra.mxu0 0
        %1039 = vmatpush.bf16.msra.mxu0 0
        %1040 = vmatpush.bf16.msra.mxu0 %v1027
        %1041 = vmatpush.bf16.msra.mxu0 %v1026
        %1042 = vmatmul.bf16.gmra.mxu0 %v1032
        %v1043 = vpop.f32.mrf.mxu0
        %v1044 = vadd.f32 %v1016, %v1043
        %v1045 = vpop.f32.mrf.mxu0
        %1046 = vdwg.mxu0
        %v1047 = vld [vmem:[%s966] sm:$0xf]
        %v1048 = vld [vmem:[%s966 + $0x4] sm:$0xf]
        %v1049 = vld [vmem:[%s966 + $0x8] sm:$0xf]
        %v1050 = vld [vmem:[%s966 + $0xc] sm:$0xf]
        %v1051 = vld [vmem:[%s969] sm:$0x1]
        %v1053 = vperm.slane %v1051, 0
        %v1059 = vunpack.c.l.b16 %v1047
        %v1060 = vunpack.c.l.b16 %v1048
        %v1061 = vunpack.c.l.b16 %v1049
        %v1062 = vunpack.c.l.b16 %v1050
        %v1063 = vpack.c.b16 %v1060, %v1059
        %v1064 = vpack.c.b16 %v1062, %v1061
        %1067 = vmatpush.bf16.msra.mxu0 0
        %1068 = vmatpush.bf16.msra.mxu0 0
        %1069 = vmatpush.bf16.msra.mxu0 0
        %1070 = vmatpush.bf16.msra.mxu0 0
        %1071 = vmatpush.bf16.msra.mxu0 0
        %1072 = vmatpush.bf16.msra.mxu0 0
        %1073 = vmatpush.bf16.msra.mxu0 %v1064
        %1074 = vmatpush.bf16.msra.mxu0 %v1063
        %1075 = vmatmul.bf16.gmra.mxu0 %v1032
        %v1076 = vpop.f32.mrf.mxu0
        %v1077 = vadd.f32 %v1053, %v1076
        %v1078 = vpop.f32.mrf.mxu0
        %1079 = vdwg.mxu0
        %v1080 = vld [vmem:[%s974] sm:$0xf]
        %v1081 = vld [vmem:[%s974 + $0x4] sm:$0xf]
        %v1082 = vld [vmem:[%s974 + $0x8] sm:$0xf]
        %v1083 = vld [vmem:[%s974 + $0xc] sm:$0xf]
        %v1084 = vld [vmem:[%s977] sm:$0x1]
        %v1086 = vperm.slane %v1084, 0
        %v1092 = vunpack.c.l.b16 %v1080
        %v1093 = vunpack.c.l.b16 %v1081
        %v1094 = vunpack.c.l.b16 %v1082
        %v1095 = vunpack.c.l.b16 %v1083
        %v1096 = vpack.c.b16 %v1093, %v1092
        %v1097 = vpack.c.b16 %v1095, %v1094
        %1100 = vmatpush.bf16.msra.mxu0 0
        %1101 = vmatpush.bf16.msra.mxu0 0
        %1102 = vmatpush.bf16.msra.mxu0 0
        %1103 = vmatpush.bf16.msra.mxu0 0
        %1104 = vmatpush.bf16.msra.mxu0 0
        %1105 = vmatpush.bf16.msra.mxu0 0
        %1106 = vmatpush.bf16.msra.mxu0 %v1097
        %1107 = vmatpush.bf16.msra.mxu0 %v1096
        %1108 = vmatmul.bf16.gmra.mxu0 %v1032
        %v1109 = vpop.f32.mrf.mxu0
        %v1110 = vadd.f32 %v1086, %v1109
        %v1111 = vpop.f32.mrf.mxu0
        %1112 = vdwg.mxu0
        %v1113 = vpack.c.bf16 %v1044, %v1044
        %v1114 = vpack.c.bf16 %v1077, %v1077
        %v1115 = vpack.c.bf16 %v1110, %v1110
        %v1117 = vperm.slane %v1009, 0
        %vm1119 = vcmask 64512
        %v1121 = vsel %vm1119, %v1113, 0
        %v1124 = vsel %vm1119, %v1114, 0
        %1126 = vmatpush.bf16.xpose.msra.mxu0 0
        %1127 = vmatpush.bf16.xpose.msra.mxu0 0
        %1128 = vmatpush.bf16.xpose.msra.mxu0 0
        %1129 = vmatpush.bf16.xpose.msra.mxu0 0
        %1130 = vmatpush.bf16.xpose.msra.mxu0 0
        %1131 = vmatpush.bf16.xpose.msra.mxu0 0
        %1132 = vmatpush.bf16.xpose.msra.mxu0 0
        %1133 = vmatpush.bf16.xpose.msra.mxu0 %v1124
        %1134 = vmatmul.bf16.gmra.mxu0 %v1121
        %v1135 = vpop.f32.mrf.mxu0
        %v1136 = vadd.f32 %v1117, %v1135
        %v1137 = vpop.f32.mrf.mxu0
        %1138 = vdwg.mxu0
        %v1139 = vsel %vm1119, %v1136, -inf
        %1140 = vmax.xlane.f32.xlu0 %v1139
        %v1141 = vpop.xlane.xlu0 %1140
        %v1142 = vsub.f32 %v1136, %v1141
        %v1143 = vmul.f32 %v1142, 1.442695
        %v1144 = vpow.pop %v1143
        %v1145 = vsel %vm1119, %v1144, 0.0
        %1146 = vadd.xlane.f32.xlu0 %v1145
        %v1147 = vpop.xlane.xlu0 %1146
        %v1148 = vpack.c.bf16 %v1144, %v1144
        %v1150 = vsel %vm1119, %v1148, 0
        %vm1152 = vcmask 1043456
        %v1154 = vsel %vm1152, %v1115, 0
        %1156 = vmatpush.bf16.msra.mxu0 0
        %1157 = vmatpush.bf16.msra.mxu0 0
        %1158 = vmatpush.bf16.msra.mxu0 0
        %1159 = vmatpush.bf16.msra.mxu0 0
        %1160 = vmatpush.bf16.msra.mxu0 0
        %1161 = vmatpush.bf16.msra.mxu0 0
        %1162 = vmatpush.bf16.msra.mxu0 0
        %1163 = vmatpush.bf16.msra.mxu0 %v1154
        %1164 = vmatmul.bf16.gmra.mxu0 %v1150
        %v1165 = vpop.f32.mrf.mxu0
        %v1166 = vadd.f32 0.0, %v1165
        %v1167 = vpop.f32.mrf.mxu0
        %1168 = vdwg.mxu0
        %v1169 = vrcp.pop %v1147
        %v1170 = vmul.f32 %v1166, %v1169
        %1171 = vst.msk [vmem:[#allocation2] sm:$0xff] %vm1119, %v1170
        %v1173 = vunpack.c.l.b16 %v1113
        %v1174 = vpack.c.b16 %v1173, %v1173
        %1175 = vrot.lane.b32.xlu0 %v1174, 120
        %v1176 = vpop.permute.xlu0 %1175
        %v1178 = vunpack.c.l.b16 %v1114
        %v1179 = vpack.c.b16 %v1178, %v1178
        %1180 = vrot.lane.b32.xlu0 %v1179, 120
        %v1181 = vpop.permute.xlu0 %1180
        %v1183 = vsel %vm1119, %v1176, 0
        %v1186 = vsel %vm1119, %v1181, 0
        %1188 = vmatpush.bf16.xpose.msra.mxu0 0
        %1189 = vmatpush.bf16.xpose.msra.mxu0 0
        %1190 = vmatpush.bf16.xpose.msra.mxu0 0
        %1191 = vmatpush.bf16.xpose.msra.mxu0 0
        %1192 = vmatpush.bf16.xpose.msra.mxu0 0
        %1193 = vmatpush.bf16.xpose.msra.mxu0 0
        %1194 = vmatpush.bf16.xpose.msra.mxu0 0
        %1195 = vmatpush.bf16.xpose.msra.mxu0 %v1186
        %1196 = vmatmul.bf16.gmra.mxu0 %v1183
        %v1197 = vpop.f32.mrf.mxu0
        %v1198 = vadd.f32 %v1117, %v1197
        %v1199 = vpop.f32.mrf.mxu0
        %1200 = vdwg.mxu0
        %v1201 = vsel %vm1119, %v1198, -inf
        %1202 = vmax.xlane.f32.xlu0 %v1201
        %v1203 = vpop.xlane.xlu0 %1202
        %v1204 = vsub.f32 %v1198, %v1203
        %v1205 = vmul.f32 %v1204, 1.442695
        %v1206 = vpow.pop %v1205
        %v1207 = vsel %vm1119, %v1206, 0.0
        %1208 = vadd.xlane.f32.xlu0 %v1207
        %v1209 = vpop.xlane.xlu0 %1208
        %v1210 = vpack.c.bf16 %v1206, %v1206
        %v1212 = vunpack.c.l.b16 %v1115
        %v1213 = vpack.c.b16 %v1212, %v1212
        %1214 = vrot.lane.b32.xlu0 %v1213, 120
        %v1215 = vpop.permute.xlu0 %1214
        %v1217 = vsel %vm1119, %v1210, 0
        %v1220 = vsel %vm1152, %v1215, 0
        %1222 = vmatpush.bf16.msra.mxu0 0
        %1223 = vmatpush.bf16.msra.mxu0 0
        %1224 = vmatpush.bf16.msra.mxu0 0
        %1225 = vmatpush.bf16.msra.mxu0 0
        %1226 = vmatpush.bf16.msra.mxu0 0
        %1227 = vmatpush.bf16.msra.mxu0 0
        %1228 = vmatpush.bf16.msra.mxu0 0
        %1229 = vmatpush.bf16.msra.mxu0 %v1220
        %1230 = vmatmul.bf16.gmra.mxu0 %v1217
        %v1231 = vpop.f32.mrf.mxu0
        %v1232 = vadd.f32 0.0, %v1231
        %v1233 = vpop.f32.mrf.mxu0
        %1234 = vdwg.mxu0
        %v1235 = vrcp.pop %v1209
        %v1236 = vmul.f32 %v1232, %v1235
        %1238 = vrot.lane.b32.xlu0 %v1236, 8
        %v1239 = vpop.permute.xlu0 %1238
        %vm1241 = vcmask 130112
        %1242 = vst.msk [vmem:[#allocation2] sm:$0xff] %vm1241, %v1239
        %1243 = vrot.lane.b32.xlu0 %v1174, 112
        %v1244 = vpop.permute.xlu0 %1243
        %1245 = vrot.lane.b32.xlu0 %v1179, 112
        %v1246 = vpop.permute.xlu0 %1245
        %v1248 = vsel %vm1119, %v1244, 0
        %v1251 = vsel %vm1119, %v1246, 0
        %1253 = vmatpush.bf16.xpose.msra.mxu0 0
        %1254 = vmatpush.bf16.xpose.msra.mxu0 0
        %1255 = vmatpush.bf16.xpose.msra.mxu0 0
        %1256 = vmatpush.bf16.xpose.msra.mxu0 0
        %1257 = vmatpush.bf16.xpose.msra.mxu0 0
        %1258 = vmatpush.bf16.xpose.msra.mxu0 0
        %1259 = vmatpush.bf16.xpose.msra.mxu0 0
        %1260 = vmatpush.bf16.xpose.msra.mxu0 %v1251
        %1261 = vmatmul.bf16.gmra.mxu0 %v1248
        %v1262 = vpop.f32.mrf.mxu0
        %v1263 = vadd.f32 %v1117, %v1262
        %v1264 = vpop.f32.mrf.mxu0
        %1265 = vdwg.mxu0
        %v1266 = vsel %vm1119, %v1263, -inf
        %1267 = vmax.xlane.f32.xlu0 %v1266
        %v1268 = vpop.xlane.xlu0 %1267
        %v1269 = vsub.f32 %v1263, %v1268
        %v1270 = vmul.f32 %v1269, 1.442695
        %v1271 = vpow.pop %v1270
        %v1272 = vsel %vm1119, %v1271, 0.0
        %1273 = vadd.xlane.f32.xlu0 %v1272
        %v1274 = vpop.xlane.xlu0 %1273
        %v1275 = vpack.c.bf16 %v1271, %v1271
        %1276 = vrot.lane.b32.xlu0 %v1213, 112
        %v1277 = vpop.permute.xlu0 %1276
        %v1279 = vsel %vm1119, %v1275, 0
        %v1282 = vsel %vm1152, %v1277, 0
        %1284 = vmatpush.bf16.msra.mxu0 0
        %1285 = vmatpush.bf16.msra.mxu0 0
        %1286 = vmatpush.bf16.msra.mxu0 0
        %1287 = vmatpush.bf16.msra.mxu0 0
        %1288 = vmatpush.bf16.msra.mxu0 0
        %1289 = vmatpush.bf16.msra.mxu0 0
        %1290 = vmatpush.bf16.msra.mxu0 0
        %1291 = vmatpush.bf16.msra.mxu0 %v1282
        %1292 = vmatmul.bf16.gmra.mxu0 %v1279
        %v1293 = vpop.f32.mrf.mxu0
        %v1294 = vadd.f32 0.0, %v1293
        %v1295 = vpop.f32.mrf.mxu0
        %1296 = vdwg.mxu0
        %v1297 = vrcp.pop %v1274
        %v1298 = vmul.f32 %v1294, %v1297
        %1300 = vrot.lane.b32.xlu0 %v1298, 16
        %v1301 = vpop.permute.xlu0 %1300
        %vm1303 = vcmask 195712
        %1304 = vst.msk [vmem:[#allocation2] sm:$0xff] %vm1303, %v1301
        %1305 = vrot.lane.b32.xlu0 %v1174, 104
        %v1306 = vpop.permute.xlu0 %1305
        %1307 = vrot.lane.b32.xlu0 %v1179, 104
        %v1308 = vpop.permute.xlu0 %1307
        %v1310 = vsel %vm1119, %v1306, 0
        %v1313 = vsel %vm1119, %v1308, 0
        %1315 = vmatpush.bf16.xpose.msra.mxu0 0
        %1316 = vmatpush.bf16.xpose.msra.mxu0 0
        %1317 = vmatpush.bf16.xpose.msra.mxu0 0
        %1318 = vmatpush.bf16.xpose.msra.mxu0 0
        %1319 = vmatpush.bf16.xpose.msra.mxu0 0
        %1320 = vmatpush.bf16.xpose.msra.mxu0 0
        %1321 = vmatpush.bf16.xpose.msra.mxu0 0
        %1322 = vmatpush.bf16.xpose.msra.mxu0 %v1313
        %1323 = vmatmul.bf16.gmra.mxu0 %v1310
        %v1324 = vpop.f32.mrf.mxu0
        %v1325 = vadd.f32 %v1117, %v1324
        %v1326 = vpop.f32.mrf.mxu0
        %1327 = vdwg.mxu0
        %v1328 = vsel %vm1119, %v1325, -inf
        %1329 = vmax.xlane.f32.xlu0 %v1328
        %v1330 = vpop.xlane.xlu0 %1329
        %v1331 = vsub.f32 %v1325, %v1330
        %v1332 = vmul.f32 %v1331, 1.442695
        %v1333 = vpow.pop %v1332
        %v1334 = vsel %vm1119, %v1333, 0.0
        %1335 = vadd.xlane.f32.xlu0 %v1334
        %v1336 = vpop.xlane.xlu0 %1335
        %v1337 = vpack.c.bf16 %v1333, %v1333
        %1338 = vrot.lane.b32.xlu0 %v1213, 104
        %v1339 = vpop.permute.xlu0 %1338
        %v1341 = vsel %vm1119, %v1337, 0
        %v1344 = vsel %vm1152, %v1339, 0
        %1346 = vmatpush.bf16.msra.mxu0 0
        %1347 = vmatpush.bf16.msra.mxu0 0
        %1348 = vmatpush.bf16.msra.mxu0 0
        %1349 = vmatpush.bf16.msra.mxu0 0
        %1350 = vmatpush.bf16.msra.mxu0 0
        %1351 = vmatpush.bf16.msra.mxu0 0
        %1352 = vmatpush.bf16.msra.mxu0 0
        %1353 = vmatpush.bf16.msra.mxu0 %v1344
        %1354 = vmatmul.bf16.gmra.mxu0 %v1341
        %v1355 = vpop.f32.mrf.mxu0
        %v1356 = vadd.f32 0.0, %v1355
        %v1357 = vpop.f32.mrf.mxu0
        %1358 = vdwg.mxu0
        %v1359 = vrcp.pop %v1336
        %v1360 = vmul.f32 %v1356, %v1359
        %1362 = vrot.lane.b32.xlu0 %v1360, 24
        %v1363 = vpop.permute.xlu0 %1362
        %vm1365 = vcmask 261312
        %1366 = vst.msk [vmem:[#allocation2] sm:$0xff] %vm1365, %v1363
        %v1367 = vld [vmem:[#allocation2] sm:$0xff]
        %v1368 = vpack.c.bf16 %v1367, %v1367
        %v1369 = vld [vmem:[%s808] sm:$0xf]
        %v1370 = vld [vmem:[%s808 + $0x4] sm:$0xf]
        %v1371 = vld [vmem:[%s808 + $0x8] sm:$0xf]
        %v1372 = vld [vmem:[%s808 + $0xc] sm:$0xf]
        %v1373 = vld [vmem:[%s980] sm:$0x1]
        %v1375 = vperm.slane %v1373, 0
        %v1381 = vunpack.c.l.b16 %v1369
        %v1382 = vunpack.c.l.b16 %v1370
        %v1383 = vunpack.c.l.b16 %v1371
        %v1384 = vunpack.c.l.b16 %v1372
        %v1385 = vpack.c.b16 %v1382, %v1381
        %v1386 = vpack.c.b16 %v1384, %v1383
        %v1390 = vsel %vm1030, %v1368, 0
        %1392 = vmatpush.bf16.msra.mxu0 0
        %1393 = vmatpush.bf16.msra.mxu0 0
        %1394 = vmatpush.bf16.msra.mxu0 0
        %1395 = vmatpush.bf16.msra.mxu0 0
        %1396 = vmatpush.bf16.msra.mxu0 0
        %1397 = vmatpush.bf16.msra.mxu0 0
        %1398 = vmatpush.bf16.msra.mxu0 %v1386
        %1399 = vmatpush.bf16.msra.mxu0 %v1385
        %1400 = vmatmul.bf16.gmra.mxu0 %v1390
        %v1401 = vpop.f32.mrf.mxu0
        %v1402 = vadd.f32 %v1375, %v1401
        %v1403 = vpop.f32.mrf.mxu0
        %1404 = vdwg.mxu0
        %v1405 = vadd.f32 %v1006, %v1402
        %v1406 = vsel %vm1030, %v1405, 0.0
        %1407 = vadd.xlane.f32.xlu0 %v1406
        %v1408 = vpop.xlane.xlu0 %1407
        %v1409 = vrcp.pop 32.0
        %v1410 = vmul.f32 32.0, %v1409
        %v1411 = vsub.f32 1.0, %v1410
        %v1412 = vmul.f32 %v1409, %v1411
        %v1413 = vadd.f32 %v1409, %v1412
        %vm1414 = vweird.f32 %v1409
        %v1415 = vsel %vm1414, %v1409, %v1413
        %v1416 = vmul.f32 %v1408, %v1415
        %v1417 = vsub.f32 %v1405, %v1416
        %v1418 = vmul.f32 %v1417, %v1417
        %v1419 = vsel %vm1030, %v1418, 0.0
        %1420 = vadd.xlane.f32.xlu0 %v1419
        %v1421 = vpop.xlane.xlu0 %1420
        %v1422 = vmul.f32 %v1421, %v1415
        %v1423 = vadd.f32 %v1422, 1e-06
        %v1424 = vrsqrt.pop %v1423
        %v1425 = vmul.f32 %v1424, %v1423
        %v1426 = vmul.f32 %v1425, %v1424
        %v1427 = vmul.f32 0.5, %v1426
        %v1428 = vsub.f32 1.5, %v1427
        %v1429 = vmul.f32 %v1424, %v1428
        %vm1430 = vweird.f32 %v1423
        %vm1431 = vweird.f32 %v1424
        %vm1432 = vmor %vm1430, %vm1431
        %v1433 = vsel %vm1432, %v1424, %v1429
        %v1434 = vmul.f32 %v1417, %v1433
        %v1435 = vld [vmem:[%s983] sm:$0x1]
        %v1437 = vperm.slane %v1435, 0
        %v1439 = vmul.f32 %v1434, %v1437
        %v1440 = vld [vmem:[%s817] sm:$0x1]
        %v1442 = vperm.slane %v1440, 0
        %v1444 = vadd.f32 %v1439, %v1442
        %v1445 = vpack.c.bf16 %v1444, %v1444
        %v1446 = vld [vmem:[%s827] sm:$0xf]
        %v1447 = vld [vmem:[%s827 + $0x4] sm:$0xf]
        %v1448 = vld [vmem:[%s827 + $0x8] sm:$0xf]
        %v1449 = vld [vmem:[%s827 + $0xc] sm:$0xf]
        %v1450 = vld [vmem:[%s986] sm:$0x1]
        %v1452 = vperm.slane %v1450, 0
        %v1458 = vunpack.c.l.b16 %v1446
        %v1459 = vunpack.c.l.b16 %v1447
        %v1460 = vunpack.c.l.b16 %v1448
        %v1461 = vunpack.c.l.b16 %v1449
        %v1462 = vpack.c.b16 %v1459, %v1458
        %v1463 = vpack.c.b16 %v1461, %v1460
        %v1467 = vsel %vm1030, %v1445, 0
        %1469 = vmatpush.bf16.msra.mxu0 0
        %1470 = vmatpush.bf16.msra.mxu0 0
        %1471 = vmatpush.bf16.msra.mxu0 0
        %1472 = vmatpush.bf16.msra.mxu0 0
        %1473 = vmatpush.bf16.msra.mxu0 0
        %1474 = vmatpush.bf16.msra.mxu0 0
        %1475 = vmatpush.bf16.msra.mxu0 %v1463
        %1476 = vmatpush.bf16.msra.mxu0 %v1462
        %1477 = vmatmul.bf16.gmra.mxu0 %v1467
        %v1478 = vpop.f32.mrf.mxu0
        %v1479 = vadd.f32 %v1452, %v1478
        %v1480 = vpop.f32.mrf.mxu0
        %1481 = vdwg.mxu0
        %v1482 = vmax.f32 %v1479, 0.0
        %v1483 = vpack.c.bf16 %v1482, %v1482
        %v1484 = vld [vmem:[%s991] sm:$0xf]
        %v1485 = vld [vmem:[%s991 + $0x4] sm:$0xf]
        %v1486 = vld [vmem:[%s991 + $0x8] sm:$0xf]
        %v1487 = vld [vmem:[%s991 + $0xc] sm:$0xf]
        %v1488 = vld [vmem:[%s991 + $0x10] sm:$0xf]
        %v1489 = vld [vmem:[%s991 + $0x14] sm:$0xf]
        %v1490 = vld [vmem:[%s991 + $0x18] sm:$0xf]
        %v1491 = vld [vmem:[%s991 + $0x1c] sm:$0xf]
        %v1492 = vld [vmem:[%s994] sm:$0x1]
        %v1494 = vperm.slane %v1492, 0
        %v1504 = vunpack.c.l.b16 %v1484
        %v1505 = vunpack.c.l.b16 %v1485
        %v1506 = vunpack.c.l.b16 %v1486
        %v1507 = vunpack.c.l.b16 %v1487
        %v1508 = vunpack.c.l.b16 %v1488
        %v1509 = vunpack.c.l.b16 %v1489
        %v1510 = vunpack.c.l.b16 %v1490
        %v1511 = vunpack.c.l.b16 %v1491
        %v1512 = vpack.c.b16 %v1505, %v1504
        %v1513 = vpack.c.b16 %v1507, %v1506
        %v1514 = vpack.c.b16 %v1509, %v1508
        %v1515 = vpack.c.b16 %v1511, %v1510
        %vm1520 = vcmask 523264
        %v1522 = vsel %vm1520, %v1483, 0
        %1524 = vmatpush.bf16.msra.mxu0 0
        %1525 = vmatpush.bf16.msra.mxu0 0
        %1526 = vmatpush.bf16.msra.mxu0 0
        %1527 = vmatpush.bf16.msra.mxu0 0
        %1528 = vmatpush.bf16.msra.mxu0 %v1515
        %1529 = vmatpush.bf16.msra.mxu0 %v1514
        %1530 = vmatpush.bf16.msra.mxu0 %v1513
        %1531 = vmatpush.bf16.msra.mxu0 %v1512
        %1532 = vmatmul.bf16.gmra.mxu0 %v1522
        %v1533 = vpop.f32.mrf.mxu0
        %v1534 = vadd.f32 %v1494, %v1533
        %v1535 = vpop.f32.mrf.mxu0
        %1536 = vdwg.mxu0
        %v1537 = vadd.f32 %v1444, %v1534
        %v1538 = vsel %vm1030, %v1537, 0.0
        %1539 = vadd.xlane.f32.xlu0 %v1538
        %v1540 = vpop.xlane.xlu0 %1539
        %v1541 = vmul.f32 %v1540, %v1415
        %v1542 = vsub.f32 %v1537, %v1541
        %v1543 = vmul.f32 %v1542, %v1542
        %v1544 = vsel %vm1030, %v1543, 0.0
        %1545 = vadd.xlane.f32.xlu0 %v1544
        %v1546 = vpop.xlane.xlu0 %1545
        %v1547 = vmul.f32 %v1546, %v1415
        %v1548 = vadd.f32 %v1547, 1e-06
        %v1549 = vrsqrt.pop %v1548
        %v1550 = vmul.f32 %v1549, %v1548
        %v1551 = vmul.f32 %v1550, %v1549
        %v1552 = vmul.f32 0.5, %v1551
        %v1553 = vsub.f32 1.5, %v1552
        %v1554 = vmul.f32 %v1549, %v1553
        %vm1555 = vweird.f32 %v1548
        %vm1556 = vweird.f32 %v1549
        %vm1557 = vmor %vm1555, %vm1556
        %v1558 = vsel %vm1557, %v1549, %v1554
        %v1559 = vmul.f32 %v1542, %v1558
        %v1560 = vld [vmem:[%s997] sm:$0x1]
        %v1562 = vperm.slane %v1560, 0
        %v1564 = vmul.f32 %v1559, %v1562
        %v1565 = vld [vmem:[%s836] sm:$0x1]
        %v1567 = vperm.slane %v1565, 0
        %v1569 = vadd.f32 %v1564, %v1567
        %1570 = vst.msk [vmem:[%s956] sm:$0xff] %vm1030, %v1569
        %s1571 = sand.u32 %s532, 1
        %s1572 = scalar_lea.sflag [#allocation5], %s1571
        %s1573 = sand.u32 %s532, 1
        %s1574 = smul.addr %s1573, 8
        %s1575 = scalar_lea.vmem [#allocation15], %s1574
        // Predicated region
        $region125: #{tpu_custom_call.1} parent=91 // pred_check
          %p1576 = pneg %p542
        $region126: #{tpu_custom_call.1} parent=91 // pred_check_branch
          %1578 = sbr.rel (%p1576) target = $region128
        $region127: #{tpu_custom_call.1} parent=91 // pred_region
          %1580 = vsyncadd %s1572, 0
          %s1581 = smul.addr %s48, 8
          %s1582 = scalar_lea.hbm %s18, %s1581
          %s1584 = sshll.u32 %s1575, 4
          %s1585 = int_to_ptr.vmem [resolvable:$true] %s1584
          %s1586 = sshll.u32 %s1582, 4
          %s1587 = int_to_ptr.hbm [resolvable:$true] %s1586
          %1589 = dma.vmem_to_hbm [thread:$0]  %s1585, 128, %s1587, %s1572
        $region128: #{tpu_custom_call.1} parent=91 // pred_fallthru
          _
      $region92: #{tpu_custom_call.1} parent=5 // pred_fallthru
        _
      %p1590 = scmp.le.s32.totalorder 2, %s39
      // Predicated region
      $region129: #{tpu_custom_call.1} parent=5 // pred_check
        %p1591 = pneg %p1590
      $region130: #{tpu_custom_call.1} parent=5 // pred_check_branch
        %1593 = sbr.rel (%p1591) target = $region132
      $region131: #{tpu_custom_call.1} parent=5 // pred_region
        %s1594 = ssub.s32 %s39, 2
        // Predicated region
        $region133: #{tpu_custom_call.1} parent=131 // pred_check
          %p1595 = pneg %p548
        $region134: #{tpu_custom_call.1} parent=131 // pred_check_branch
          %1597 = sbr.rel (%p1595) target = $region136
        $region135: #{tpu_custom_call.1} parent=131 // pred_region
          %s1598 = sand.u32 %s533, 1
          %s1599 = scalar_lea.sflag [#allocation5], %s1598
          %s1600 = sand.u32 %s533, 1
          %s1601 = smul.addr %s1600, 8
          %s1602 = scalar_lea.vmem [#allocation15], %s1601
          %1604 = dma.done %s1599, 128
        $region136: #{tpu_custom_call.1} parent=131 // pred_fallthru
          _
      $region132: #{tpu_custom_call.1} parent=5 // pred_fallthru
        _
    $region6: #{tpu_custom_call.1} parent=1 // loop_footer
      %s43 = sadd.s32 1, %s39
    $region7: #{tpu_custom_call.1} parent=1 // loop_footer_branch
      %38 = sbr.rel target = $region3
    $region8: #{tpu_custom_call.1} parent=1 // loop_exit
      _
    %1605 = vsyncpa [#allocation4], 1
    %s1606 = scalar_lea.sflag [#allocation4], 1
    %1607 = vsyncpa %s1606, 1
    %1608 = vsyncpa [#allocation7], 1
    %s1609 = scalar_lea.sflag [#allocation7], 1
    %1610 = vsyncpa %s1609, 1
    %1611 = vsyncpa [#allocation10], 1
    %s1612 = scalar_lea.sflag [#allocation10], 1
    %1613 = vsyncpa %s1612, 1
    %1614 = vsyncpa [#allocation13], 1
    %s1615 = scalar_lea.sflag [#allocation13], 1
    %1616 = vsyncpa %s1615, 1
    %1617 = vsyncpa [#allocation5], 1
    %s1618 = scalar_lea.sflag [#allocation5], 1
    %1619 = vsyncpa %s1618, 1

</llo_original>
